<compile_context>
chip_gen: v7x
topology: tpu7x:2x2x1
jax: 0.10.0
libtpu: 0.0.40
codegen_flags: <defaults>
</compile_context>

<pallas_src>
import math
from functools import partial

import jax
import jax.numpy as jnp
from jax.experimental import pallas as pl
from jax.experimental.pallas import tpu as pltpu

FEATURE_DIM = 1408          # efficientnet-b2 feature dim (self.feature_out_dim)
PATCH = 32                  # EfficientNet-B2 total spatial downsample factor
POOL_T = 4                  # nn.AvgPool2d((4, 1)) kernel on the downsampled time axis
K_DIM = PATCH * PATCH       # 1024: flattened 32x32 patch
C_PAD = 1536                # 1408 zero-padded up to a multiple of 256 (MXU-aligned)
TC = 256                    # channel tile width (fills the 256x256 MXU on v6e/v7x)
L_PAD = 128                 # label dim padded to one full lane width (dense stores)


def _fused_kernel(p_ref, ws_ref, bs_ref, wc_ref, bc_ref, o_ref, acc_ref, *, label_dim):
    """One (sample n, channel-tile c) grid step of the fused forward.

    p_ref : (1, Rn, K_DIM) bf16   patches of the consumed time window
    ws_ref: (K_DIM, TC)    bf16   stand-in backbone projection (channel tile)
    bs_ref: (1, TC)        f32    stand-in backbone bias       (channel tile)
    wc_ref: (TC, L_PAD)    f32    MeanPooling 1x1-conv weight  (channel tile)
    bc_ref: (1, L_PAD)     f32    MeanPooling 1x1-conv bias
    o_ref : (1, 1, L_PAD)  f32    softmax probabilities (lane-padded)
    acc_ref:(1, L_PAD)     f32    logit accumulator across channel tiles
    """
    c = pl.program_id(1)

    @pl.when(c == 0)
    def _():
        acc_ref[...] = bc_ref[...]          # start the logits from the conv bias

    # Stand-in backbone: patch-embed matmul for this channel tile (MXU, f32 acc).
    feats = jnp.dot(p_ref[0], ws_ref[...], preferred_element_type=jnp.float32)
    feats = feats + bs_ref[...]                               # (Rn, TC)

    # AvgPool2d((4,1)) window 0 followed by mean over freq bins == uniform mean
    # over all Rn = POOL_T*F32 rows.  The affine 1x1 conv commutes with the
    # mean, so reduce first and do a tiny (1,TC)x(TC,L_PAD) dot.
    pooled = jnp.mean(feats, axis=0, keepdims=True)           # (1, TC)
    acc_ref[...] += jnp.dot(pooled, wc_ref[...], preferred_element_type=jnp.float32)

    @pl.when(c == pl.num_programs(1) - 1)
    def _():
        logits = acc_ref[...]                                 # (1, L_PAD)
        lane = jax.lax.broadcasted_iota(jnp.int32, logits.shape, 1)
        logits = jnp.where(lane < label_dim, logits, -1e30)   # mask padded labels
        z = logits - jnp.max(logits, axis=-1, keepdims=True)
        e = jnp.exp(z)
        inv = pl.reciprocal(jnp.sum(e, axis=-1, keepdims=True), approx=True)
        o_ref[...] = (e * inv).reshape(o_ref.shape)


@partial(jax.jit, static_argnames=("label_dim",))
def efficient_net_forward(x, w_stem, b_stem, w_cla, b_cla, *, label_dim):
    """x: (N, F, T) float32 -> softmax probabilities (N, label_dim) float32."""
    N, F, T = x.shape
    F32, T32 = F // PATCH, T // PATCH
    assert T32 >= POOL_T, "need T >= 128 so AvgPool2d((4,1)) has >= 1 time window"
    Rn = POOL_T * F32                  # patches per sample that are actually consumed

    # Only the first AvgPool time window survives the downstream cla[:, :, :, 0]
    # slice, so patchify just that raw-time slab of x (the wrapper transposes
    # touch only an (N, F, 128) window instead of the whole input).
    xw = x[:, :, : POOL_T * PATCH]                      # (N, F, 128)
    xt = jnp.transpose(xw, (0, 2, 1))                   # (N, 128, F)   time-major
    p = xt.reshape(N, POOL_T, PATCH, F32, PATCH)
    p = jnp.transpose(p, (0, 1, 3, 2, 4))               # (N, POOL_T, F32, 32, 32)
    p = p.reshape(N, Rn, K_DIM).astype(jnp.bfloat16)

    kernel = partial(_fused_kernel, label_dim=label_dim)
    out = pl.pallas_call(
        kernel,
        out_shape=jax.ShapeDtypeStruct((N, 1, L_PAD), jnp.float32),
        grid_spec=pltpu.PrefetchScalarGridSpec(
            num_scalar_prefetch=0,
            grid=(N, C_PAD // TC),                      # channel reduction axis last
            in_specs=[
                pl.BlockSpec((1, Rn, K_DIM), lambda n, c: (n, 0, 0)),
                pl.BlockSpec((K_DIM, TC), lambda n, c: (0, c)),
                pl.BlockSpec((1, TC), lambda n, c: (0, c)),
                pl.BlockSpec((TC, L_PAD), lambda n, c: (c, 0)),
                pl.BlockSpec((1, L_PAD), lambda n, c: (0, 0)),
            ],
            out_specs=pl.BlockSpec((1, 1, L_PAD), lambda n, c: (n, 0, 0)),
            scratch_shapes=[pltpu.VMEM((1, L_PAD), jnp.float32)],
        ),
        compiler_params=pltpu.CompilerParams(
            dimension_semantics=("parallel", "arbitrary"),
        ),
    )(p, w_stem.astype(jnp.bfloat16), b_stem, w_cla, b_cla)
    return out[:, 0, :label_dim]


def init_params(key, label_dim):
    k1, k2 = jax.random.split(key)
    # Stand-in backbone projection weights (deterministic synthetic stem);
    # channels 1408..1535 are zero padding.
    w_stem = jnp.zeros((K_DIM, C_PAD), jnp.float32)
    w_stem = w_stem.at[:, :FEATURE_DIM].set(
        jax.random.normal(k1, (K_DIM, FEATURE_DIM), jnp.float32) / math.sqrt(K_DIM))
    b_stem = jnp.zeros((1, C_PAD), jnp.float32)
    # MeanPooling 1x1 conv init (MeanPooling.init_layer): torch weight (L, C, 1, 1),
    # uniform(-scale, scale) with scale = sqrt(2/n)*sqrt(3), n = C*1*1; bias = 0.
    # Stored transposed and zero-padded as (C_PAD, L_PAD).
    n = FEATURE_DIM
    scale = math.sqrt(2.0 / n) * math.sqrt(3.0)
    w_raw = jax.random.uniform(k2, (label_dim, FEATURE_DIM), jnp.float32, -scale, scale)
    w_cla = jnp.zeros((C_PAD, L_PAD), jnp.float32)
    w_cla = w_cla.at[:FEATURE_DIM, :label_dim].set(jnp.transpose(w_raw))
    b_cla = jnp.zeros((1, L_PAD), jnp.float32)
    return w_stem, b_stem, w_cla, b_cla


def reference_forward(x, w_stem, b_stem, w_cla, b_cla, label_dim):
    """Pure-JAX f32 reference (full feature map, unfused) for correctness check."""
    N, F, T = x.shape
    F32, T32 = F // PATCH, T // PATCH
    xt = jnp.transpose(x, (0, 2, 1))                          # (N, T, F)
    p = xt.reshape(N, T32, PATCH, F32, PATCH).transpose(0, 1, 3, 2, 4)
    p = p.reshape(N, T32, F32, K_DIM)
    feats = p @ w_stem + b_stem                               # (N, T32, F32, C_PAD)
    nt = T32 // POOL_T                                        # AvgPool2d((4,1)) on time
    pooled = feats[:, : nt * POOL_T].reshape(N, nt, POOL_T, F32, C_PAD).mean(axis=2)
    cla = pooled[:, 0] @ w_cla + b_cla                        # 1x1 conv, time window 0
    cla = cla.mean(axis=1)[:, :label_dim]                     # mean over freq bins
    return jax.nn.softmax(cla, axis=-1)


if __name__ == "__main__":
    key = jax.random.PRNGKey(0)
    kx, kp = jax.random.split(key)

    # Small shapes consistent with the forward: T >= 128 so the /32-downsampled
    # time axis has at least one AvgPool2d((4,1)) window; F a multiple of 32.
    N, F, T = 2, 64, 128
    label_dim = 10

    x = jax.random.normal(kx, (N, F, T), jnp.float32)
    w_stem, b_stem, w_cla, b_cla = init_params(kp, label_dim)

    out = jax.block_until_ready(
        efficient_net_forward(x, w_stem, b_stem, w_cla, b_cla, label_dim=label_dim))
    ref = reference_forward(x, w_stem, b_stem, w_cla, b_cla, label_dim)

    assert out.shape == (N, label_dim)
    # bf16 matmul operands + approx-reciprocal softmax => loose tolerance.
    assert bool(jnp.allclose(jnp.sum(out, axis=-1), 1.0, atol=1e-2))
    assert bool(jnp.allclose(out, ref, atol=1e-2))
    print("KERNEL_OK")
</pallas_src>

<mosaic_0001>
module attributes {stable_mosaic.version = 11 : i64} {
  func.func @_fused_kernel(%arg0: i32, %arg1: i32, %arg2: memref<1x8x1024xbf16, #tpu.memory_space<vmem>>, %arg3: memref<1024x256xbf16, #tpu.memory_space<vmem>>, %arg4: memref<1x256xf32, #tpu.memory_space<vmem>>, %arg5: memref<256x128xf32, #tpu.memory_space<vmem>>, %arg6: memref<1x128xf32, #tpu.memory_space<vmem>>, %arg7: memref<1x1x128xf32, #tpu.memory_space<vmem>>, %arg8: memref<1x128xf32, #tpu.memory_space<vmem>>) attributes {dimension_semantics = [#tpu.dimension_semantics<parallel>, #tpu.dimension_semantics<arbitrary>], iteration_bounds = array<i64: 2, 6>, scalar_prefetch = 0 : i64, scratch_operands = 1 : i64, tpu.core_type = #tpu.core_type<tc>, window_params = [{transform_indices = @transform_0, window_bounds = array<i64: 1, 8, 1024>}, {transform_indices = @transform_1, window_bounds = array<i64: 1024, 256>}, {transform_indices = @transform_2, window_bounds = array<i64: 1, 256>}, {transform_indices = @transform_3, window_bounds = array<i64: 256, 128>}, {pipeline_mode = #tpu.pipeline_mode<synchronous>, transform_indices = @transform_4, window_bounds = array<i64: 1, 128>}, {transform_indices = @transform_5, window_bounds = array<i64: 1, 1, 128>}]} {
    %c0_i32 = arith.constant 0 : i32
    %0 = arith.cmpi eq, %arg1, %c0_i32 : i32
    %1 = arith.extui %0 : i1 to i32
    %c0_i32_0 = arith.constant 0 : i32
    %2 = arith.cmpi ne, %1, %c0_i32_0 : i32
    scf.if %2 {
      %c0_17 = arith.constant 0 : index
      %c0_18 = arith.constant 0 : index
      %22 = vector.load %arg6[%c0_17, %c0_18] : memref<1x128xf32, #tpu.memory_space<vmem>>, vector<1x128xf32>
      %c0_19 = arith.constant 0 : index
      %c0_20 = arith.constant 0 : index
      %23 = vector.load %arg8[%c0_19, %c0_20] : memref<1x128xf32, #tpu.memory_space<vmem>>, vector<1x128xf32>
      tpu.vector_store %arg8[%c0_19, %c0_20], %22 {strides = array<i32>} : memref<1x128xf32, #tpu.memory_space<vmem>>, vector<1x128xf32>,
    } else {
    }
    %c0 = arith.constant 0 : index
    %c0_1 = arith.constant 0 : index
    %c0_2 = arith.constant 0 : index
    %3 = vector.load %arg2[%c0, %c0_1, %c0_2] : memref<1x8x1024xbf16, #tpu.memory_space<vmem>>, vector<1x8x1024xbf16>
    %4 = vector.shape_cast %3 : vector<1x8x1024xbf16> to vector<8x1024xbf16>
    %c0_3 = arith.constant 0 : index
    %c0_4 = arith.constant 0 : index
    %5 = vector.load %arg3[%c0_3, %c0_4] : memref<1024x256xbf16, #tpu.memory_space<vmem>>, vector<1024x256xbf16>
    %cst = arith.constant dense<0.000000e+00> : vector<8x256xf32>
    %6 = tpu.matmul %4, %5, %cst {dimension_numbers = #tpu.dot_dimension_numbers<[1], [0], [0], [1], [0, 0, 1, 1], [], []>} : vector<8x1024xbf16>, vector<1024x256xbf16>, vector<8x256xf32> -> vector<8x256xf32>
    %c0_5 = arith.constant 0 : index
    %c0_6 = arith.constant 0 : index
    %7 = vector.load %arg4[%c0_5, %c0_6] : memref<1x256xf32, #tpu.memory_space<vmem>>, vector<1x256xf32>
    %8 = vector.broadcast %7 : vector<1x256xf32> to vector<8x256xf32>
    %9 = arith.addf %6, %8 : vector<8x256xf32>
    %cst_7 = arith.constant dense<0.000000e+00> : vector<256xf32>
    %10 = vector.multi_reduction <add>, %9, %cst_7 [0] : vector<8x256xf32> to vector<256xf32>
    %11 = vector.shape_cast %10 : vector<256xf32> to vector<1x256xf32>
    %cst_8 = arith.constant 8.000000e+00 : f32
    %12 = vector.broadcast %cst_8 : f32 to vector<1x256xf32>
    %13 = arith.divf %11, %12 : vector<1x256xf32>
    %c0_9 = arith.constant 0 : index
    %c0_10 = arith.constant 0 : index
    %14 = vector.load %arg8[%c0_9, %c0_10] : memref<1x128xf32, #tpu.memory_space<vmem>>, vector<1x128xf32>
    %c0_11 = arith.constant 0 : index
    %c0_12 = arith.constant 0 : index
    %15 = vector.load %arg5[%c0_11, %c0_12] : memref<256x128xf32, #tpu.memory_space<vmem>>, vector<256x128xf32>
    %cst_13 = arith.constant dense<0.000000e+00> : vector<1x128xf32>
    %16 = tpu.matmul %13, %15, %cst_13 {dimension_numbers = #tpu.dot_dimension_numbers<[1], [0], [0], [1], [0, 0, 1, 1], [], []>} : vector<1x256xf32>, vector<256x128xf32>, vector<1x128xf32> -> vector<1x128xf32>
    %17 = arith.addf %14, %16 : vector<1x128xf32>
    %c0_14 = arith.constant 0 : index
    %c0_15 = arith.constant 0 : index
    %18 = vector.load %arg8[%c0_14, %c0_15] : memref<1x128xf32, #tpu.memory_space<vmem>>, vector<1x128xf32>
    tpu.vector_store %arg8[%c0_14, %c0_15], %17 {strides = array<i32>} : memref<1x128xf32, #tpu.memory_space<vmem>>, vector<1x128xf32>,
    %c5_i32 = arith.constant 5 : i32
    %19 = arith.cmpi eq, %arg1, %c5_i32 : i32
    %20 = arith.extui %19 : i1 to i32
    %c0_i32_16 = arith.constant 0 : i32
    %21 = arith.cmpi ne, %20, %c0_i32_16 : i32
    scf.if %21 {
      %c0_17 = arith.constant 0 : index
      %c0_18 = arith.constant 0 : index
      %22 = vector.load %arg8[%c0_17, %c0_18] : memref<1x128xf32, #tpu.memory_space<vmem>>, vector<1x128xf32>
      %23 = tpu.iota {dimensions = array<i32: 1>} : vector<1x128xi32>
      %c10_i32 = arith.constant 10 : i32
      %24 = vector.broadcast %c10_i32 : i32 to vector<1x128xi32>
      %25 = arith.cmpi slt, %23, %24 : vector<1x128xi32>
      %cst_19 = arith.constant -1.000000e+30 : f32
      %26 = vector.broadcast %cst_19 : f32 to vector<1x128xf32>
      %27 = arith.select %25, %22, %26 : vector<1x128xi1>, vector<1x128xf32>
      %cst_20 = arith.constant dense<0xFF800000> : vector<1xf32>
      %28 = vector.multi_reduction <maximumf>, %27, %cst_20 [1] : vector<1x128xf32> to vector<1xf32>
      %29 = vector.shape_cast %28 : vector<1xf32> to vector<1x1xf32>
      %30 = vector.broadcast %29 : vector<1x1xf32> to vector<1x128xf32>
      %31 = arith.subf %27, %30 : vector<1x128xf32>
      %32 = math.exp %31 : vector<1x128xf32>
      %cst_21 = arith.constant dense<0.000000e+00> : vector<1xf32>
      %33 = vector.multi_reduction <add>, %32, %cst_21 [1] : vector<1x128xf32> to vector<1xf32>
      %34 = vector.shape_cast %33 : vector<1xf32> to vector<1x1xf32>
      %35 = tpu.reciprocal %34 {approx = true} : vector<1x1xf32> -> vector<1x1xf32>
      %36 = vector.broadcast %35 : vector<1x1xf32> to vector<1x128xf32>
      %37 = arith.mulf %32, %36 : vector<1x128xf32>
      %38 = vector.shape_cast %37 : vector<1x128xf32> to vector<1x1x128xf32>
      %c0_22 = arith.constant 0 : index
      %c0_23 = arith.constant 0 : index
      %c0_24 = arith.constant 0 : index
      %39 = vector.load %arg7[%c0_22, %c0_23, %c0_24] : memref<1x1x128xf32, #tpu.memory_space<vmem>>, vector<1x1x128xf32>
      tpu.vector_store %arg7[%c0_22, %c0_23, %c0_24], %38 {strides = array<i32>} : memref<1x1x128xf32, #tpu.memory_space<vmem>>, vector<1x1x128xf32>,
    } else {
    }
    return
  }
  func.func @transform_0(%arg0: i32, %arg1: i32) -> (i32, i32, i32) {
    %c0_i32 = arith.constant 0 : i32
    %c0_i32_0 = arith.constant 0 : i32
    %c0_i32_1 = arith.constant 0 : i32
    return %arg0, %c0_i32, %c0_i32_0 : i32, i32, i32
  }
  func.func @transform_1(%arg0: i32, %arg1: i32) -> (i32, i32) {
    %c0_i32 = arith.constant 0 : i32
    %c0_i32_0 = arith.constant 0 : i32
    return %c0_i32, %arg1 : i32, i32
  }
  func.func @transform_2(%arg0: i32, %arg1: i32) -> (i32, i32) {
    %c0_i32 = arith.constant 0 : i32
    %c0_i32_0 = arith.constant 0 : i32
    return %c0_i32, %arg1 : i32, i32
  }
  func.func @transform_3(%arg0: i32, %arg1: i32) -> (i32, i32) {
    %c0_i32 = arith.constant 0 : i32
    %c0_i32_0 = arith.constant 0 : i32
    return %arg1, %c0_i32 : i32, i32
  }
  func.func @transform_4(%arg0: i32, %arg1: i32) -> (i32, i32) {
    %c0_i32 = arith.constant 0 : i32
    %c0_i32_0 = arith.constant 0 : i32
    %c0_i32_1 = arith.constant 0 : i32
    return %c0_i32, %c0_i32_0 : i32, i32
  }
  func.func @transform_5(%arg0: i32, %arg1: i32) -> (i32, i32, i32) {
    %c0_i32 = arith.constant 0 : i32
    %c0_i32_0 = arith.constant 0 : i32
    %c0_i32_1 = arith.constant 0 : i32
    return %arg0, %c0_i32, %c0_i32_0 : i32, i32, i32
  }
}

</mosaic_0001>

<llo_original>
// kernel: efficient_net_forward.1
$region0: #{efficient_net_forward.1}
  #allocation0 [shape = 'u32[]', space=smem, size = 0x4, offset = 0x4, fixed_abs, tag = 'smem constant byte address 0x4 - core index']
  #allocation1 [shape = 'u32[144,128]{1,0:T(1,128)}', space=vmem, size = 0x12000, scoped, tag = 'internal scratch']
  #allocation2 [shape = 'f32[1,128]{1,0:T(1,128)}', space=vmem, size = 0x200, scoped, tag = 'scratch operand']
  %s0 = inlined_call_operand.vmem [shape: bf16[2,8,1024], index: 0, kind: input, shape index: {}]
  %s1 = inlined_call_operand.vmem [shape: bf16[1024,1536], index: 1, kind: input, shape index: {}]
  %s2 = inlined_call_operand.vmem [shape: f32[1,1536], index: 2, kind: input, shape index: {}]
  %s3 = inlined_call_operand.vmem [shape: f32[1536,128], index: 3, kind: input, shape index: {}]
  %s4 = inlined_call_operand.vmem [shape: f32[1,128], index: 4, kind: input, shape index: {}]
  %s5 = inlined_call_operand.hbm [shape: f32[2,1,128], index: 5, kind: output, shape index: {}]
  %s6 = sld [smem:[#allocation0]]
  $region99: #{efficient_net_forward.1} parent=0
    _
  %s8 = ssub.s32 1, %s6
  %s9 = scalar_select 0, %s8, %s6
  $region1: #{efficient_net_forward.1} parent=0
    #allocation3 [shape = 'u8[1048576]{0}', space=vmem, size = 0x100000, scoped, tag = 'input window, operand 1']
    #allocation4 [shape = 'u8[1024]{0}', space=vmem, size = 0x400, scoped, tag = 'output window, operand 0']
    #allocation5 [shape = 's32[2]{0}', space=sflag, size = 0x8, scoped, tag = 'scoped memory for efficient_net_forward.1']
    %10 = vsyncpa [#allocation5], 0
    %s11 = scalar_lea.sflag [#allocation5], 1
    %12 = vsyncpa %s11, 0
    loop: start=0, step=1, limit=14
    $region2: #{efficient_net_forward.1} parent=1 // loop_pre_header
      _
    $region3: #{efficient_net_forward.1} parent=1 // loop_header
      %s14 = sphi 0, %s18
      %p15 = scmp.ge.s32.totalorder %s14, 14
      %s21 = sphi 0, %s33
      %s22 = sphi 0, %s29
      %s23 = sphi 0, %s21
      %s24 = sphi 0, %s22
      %s25 = sphi 0, %s23
      %s26 = sphi 0, %s24
      %s36 = sphi 0, %s38
      %s39 = sphi 0, %s36
      %s40 = sphi 0, %s39
      %s56 = sphi 0, %s40
      %s62 = sphi 0, %s64
      %s65 = sphi 0, %s62
      %s66 = sphi 0, %s65
      %s82 = sphi 0, %s66
      %s88 = sphi 0, %s90
      %s91 = sphi 0, %s88
      %s92 = sphi 0, %s91
      %s108 = sphi 0, %s92
      %s114 = sphi 0, %s116
      %s117 = sphi 0, %s114
      %s118 = sphi 0, %s117
      %s134 = sphi 0, %s118
      %s138 = sphi 0, %s138
      %s140 = sphi 0, %s138
      %s141 = sphi 0, %s140
      %s155 = sphi 0, %s141
      %s161 = sphi 0, %s163
      %s164 = sphi 0, %s161
      %s165 = sphi 0, %s164
      %s181 = sphi 0, %s165
    $region4: #{efficient_net_forward.1} parent=1 // loop_header_branch
      %17 = sbr.rel (%p15) target = $region8
    $region5: #{efficient_net_forward.1} parent=1 // loop_body
      %s19 = ssub.s32 %s14, 1
      %s20 = ssub.s32 %s14, 2
      %s27 = sadd.s32 1, %s22
      %p28 = scmp.ge.s32.totalorder %s27, 6
      %s29 = scalar_select %p28, 0, %s27
      %s30 = sadd.s32 1, %s21
      %s31 = scalar_select %p28, %s30, %s21
      %p32 = scmp.ge.s32.totalorder %s31, 2
      %s33 = scalar_select %p32, 0, %s31
      %s34 = ssub.s32 %s21, %s33
      %p35 = scmp.eq.s32.totalorder %s34, 0
      %s37 = sadd.s32 %s36, 1
      %s38 = scalar_select %p35, %s36, %s37
      %p41 = pneg %p35
      %p42 = scmp.eq.s32.totalorder %s14, 11
      %p43 = por %p41, %p42
      %p44 = scmp.ne.s32.totalorder %s36, %s39
      %p45 = scmp.eq.s32.totalorder %s14, 0
      %p46 = por %p44, %p45
      %p47 = scmp.ne.s32.totalorder %s36, %s39
      %p48 = scmp.eq.s32.totalorder %s19, 11
      %p49 = por %p47, %p48
      %p50 = scmp.ne.s32.totalorder %s39, %s40
      %p51 = scmp.eq.s32.totalorder %s19, 0
      %p52 = por %p50, %p51
      %p53 = scmp.ne.s32.totalorder %s39, %s40
      %p54 = scmp.eq.s32.totalorder %s20, 11
      %p55 = por %p53, %p54
      %p57 = scmp.ne.s32.totalorder %s40, %s56
      %p58 = scmp.eq.s32.totalorder %s20, 0
      %p59 = por %p57, %p58
      %s60 = ssub.s32 %s22, %s29
      %p61 = scmp.eq.s32.totalorder %s60, 0
      %s63 = sadd.s32 %s62, 1
      %s64 = scalar_select %p61, %s62, %s63
      %p67 = pneg %p61
      %p68 = scmp.eq.s32.totalorder %s14, 11
      %p69 = por %p67, %p68
      %p70 = scmp.ne.s32.totalorder %s62, %s65
      %p71 = scmp.eq.s32.totalorder %s14, 0
      %p72 = por %p70, %p71
      %p73 = scmp.ne.s32.totalorder %s62, %s65
      %p74 = scmp.eq.s32.totalorder %s19, 11
      %p75 = por %p73, %p74
      %p76 = scmp.ne.s32.totalorder %s65, %s66
      %p77 = scmp.eq.s32.totalorder %s19, 0
      %p78 = por %p76, %p77
      %p79 = scmp.ne.s32.totalorder %s65, %s66
      %p80 = scmp.eq.s32.totalorder %s20, 11
      %p81 = por %p79, %p80
      %p83 = scmp.ne.s32.totalorder %s66, %s82
      %p84 = scmp.eq.s32.totalorder %s20, 0
      %p85 = por %p83, %p84
      %s86 = ssub.s32 %s22, %s29
      %p87 = scmp.eq.s32.totalorder %s86, 0
      %s89 = sadd.s32 %s88, 1
      %s90 = scalar_select %p87, %s88, %s89
      %p93 = pneg %p87
      %p94 = scmp.eq.s32.totalorder %s14, 11
      %p95 = por %p93, %p94
      %p96 = scmp.ne.s32.totalorder %s88, %s91
      %p97 = scmp.eq.s32.totalorder %s14, 0
      %p98 = por %p96, %p97
      %p99 = scmp.ne.s32.totalorder %s88, %s91
      %p100 = scmp.eq.s32.totalorder %s19, 11
      %p101 = por %p99, %p100
      %p102 = scmp.ne.s32.totalorder %s91, %s92
      %p103 = scmp.eq.s32.totalorder %s19, 0
      %p104 = por %p102, %p103
      %p105 = scmp.ne.s32.totalorder %s91, %s92
      %p106 = scmp.eq.s32.totalorder %s20, 11
      %p107 = por %p105, %p106
      %p109 = scmp.ne.s32.totalorder %s92, %s108
      %p110 = scmp.eq.s32.totalorder %s20, 0
      %p111 = por %p109, %p110
      %s112 = ssub.s32 %s22, %s29
      %p113 = scmp.eq.s32.totalorder %s112, 0
      %s115 = sadd.s32 %s114, 1
      %s116 = scalar_select %p113, %s114, %s115
      %p119 = pneg %p113
      %p120 = scmp.eq.s32.totalorder %s14, 11
      %p121 = por %p119, %p120
      %p122 = scmp.ne.s32.totalorder %s114, %s117
      %p123 = scmp.eq.s32.totalorder %s14, 0
      %p124 = por %p122, %p123
      %p125 = scmp.ne.s32.totalorder %s114, %s117
      %p126 = scmp.eq.s32.totalorder %s19, 11
      %p127 = por %p125, %p126
      %p128 = scmp.ne.s32.totalorder %s117, %s118
      %p129 = scmp.eq.s32.totalorder %s19, 0
      %p130 = por %p128, %p129
      %p131 = scmp.ne.s32.totalorder %s117, %s118
      %p132 = scmp.eq.s32.totalorder %s20, 11
      %p133 = por %p131, %p132
      %p135 = scmp.ne.s32.totalorder %s118, %s134
      %p136 = scmp.eq.s32.totalorder %s20, 0
      %p137 = por %p135, %p136
      %s139 = sadd.s32 %s138, 1
      %p142 = scmp.eq.s32.totalorder %s14, 11
      %p143 = scmp.ne.s32.totalorder %s138, %s140
      %p144 = scmp.eq.s32.totalorder %s14, 0
      %p145 = por %p143, %p144
      %p146 = scmp.ne.s32.totalorder %s138, %s140
      %p147 = scmp.eq.s32.totalorder %s19, 11
      %p148 = por %p146, %p147
      %p149 = scmp.ne.s32.totalorder %s140, %s141
      %p150 = scmp.eq.s32.totalorder %s19, 0
      %p151 = por %p149, %p150
      %p152 = scmp.ne.s32.totalorder %s140, %s141
      %p153 = scmp.eq.s32.totalorder %s20, 11
      %p154 = por %p152, %p153
      %p156 = scmp.ne.s32.totalorder %s141, %s155
      %p157 = scmp.eq.s32.totalorder %s20, 0
      %p158 = por %p156, %p157
      %s159 = ssub.s32 %s21, %s33
      %p160 = scmp.eq.s32.totalorder %s159, 0
      %s162 = sadd.s32 %s161, 1
      %s163 = scalar_select %p160, %s161, %s162
      %p166 = pneg %p160
      %p167 = scmp.eq.s32.totalorder %s14, 11
      %p168 = por %p166, %p167
      %p169 = scmp.ne.s32.totalorder %s161, %s164
      %p170 = scmp.eq.s32.totalorder %s14, 0
      %p171 = por %p169, %p170
      %p172 = scmp.ne.s32.totalorder %s161, %s164
      %p173 = scmp.eq.s32.totalorder %s19, 11
      %p174 = por %p172, %p173
      %p175 = scmp.ne.s32.totalorder %s164, %s165
      %p176 = scmp.eq.s32.totalorder %s19, 0
      %p177 = por %p175, %p176
      %p178 = scmp.ne.s32.totalorder %s164, %s165
      %p179 = scmp.eq.s32.totalorder %s20, 11
      %p180 = por %p178, %p179
      %p182 = scmp.ne.s32.totalorder %s165, %s181
      %p183 = scmp.eq.s32.totalorder %s20, 0
      %p184 = por %p182, %p183
      %p185 = scmp.le.s32.totalorder 1, %s14
      %p186 = scmp.lt.s32.totalorder %s14, 13
      %p187 = pnand %p185, %p186
      %p188 = pneg %p187
      // Predicated region
      $region9: #{efficient_net_forward.1} parent=5 // pred_check
        _
      $region10: #{efficient_net_forward.1} parent=5 // pred_check_branch
        %190 = sbr.rel (%p187) target = $region12
      $region11: #{efficient_net_forward.1} parent=5 // pred_region
        %s191 = ssub.s32 %s14, 1
        // Predicated region
        $region13: #{efficient_net_forward.1} parent=11 // pred_check
          %p192 = pneg %p151
        $region14: #{efficient_net_forward.1} parent=11 // pred_check_branch
          %194 = sbr.rel (%p192) target = $region16
        $region15: #{efficient_net_forward.1} parent=11 // pred_region
          _
        $region16: #{efficient_net_forward.1} parent=11 // pred_fallthru
          _
      $region12: #{efficient_net_forward.1} parent=5 // pred_fallthru
        _
      %p195 = scmp.lt.s32.totalorder %s14, 12
      // Predicated region
      $region17: #{efficient_net_forward.1} parent=5 // pred_check
        %p196 = pneg %p195
      $region18: #{efficient_net_forward.1} parent=5 // pred_check_branch
        %198 = sbr.rel (%p196) target = $region20
      $region19: #{efficient_net_forward.1} parent=5 // pred_region
        // Predicated region
        $region21: #{efficient_net_forward.1} parent=19 // pred_check
          %p199 = pneg %p46
        $region22: #{efficient_net_forward.1} parent=19 // pred_check_branch
          %201 = sbr.rel (%p199) target = $region24
        $region23: #{efficient_net_forward.1} parent=19 // pred_region
          %p202 = scmp.lt.s32.totalorder %s21, 1
          %s203 = scalar_select %p202, %s21, 1
          %s204 = smul.addr %s203, 8
          %s205 = smul.addr %s204, 4
          %s206 = scalar_lea.vmem %s0, %s205
        $region24: #{efficient_net_forward.1} parent=19 // pred_fallthru
          _
        // Predicated region
        $region25: #{efficient_net_forward.1} parent=19 // pred_check
          %p207 = pneg %p72
        $region26: #{efficient_net_forward.1} parent=19 // pred_check_branch
          %209 = sbr.rel (%p207) target = $region28
        $region27: #{efficient_net_forward.1} parent=19 // pred_region
          %s210 = sand.u32 %s62, 1
          %s211 = sand.u32 %s62, 1
          %s212 = smul.addr %s211, 1024
          %s213 = scalar_lea.vmem [#allocation3], %s212
          %s214 = smul.u32 2, %s22
          %s215 = smul.addr %s214, 4
          %s216 = scalar_lea.vmem %s1, %s215
          // Predicated region
          $region29: #{efficient_net_forward.1} parent=27 // pred_check
            _
          $region30: #{efficient_net_forward.1} parent=27 // pred_check_branch
            %218 = sbr.rel (0) target = $region32
          $region31: #{efficient_net_forward.1} parent=27 // pred_region
            // Predicated region
            $region33: #{efficient_net_forward.1} parent=31 // pred_check
              _
            $region34: #{efficient_net_forward.1} parent=31 // pred_check_branch
              %220 = sbr.rel (0) target = $region36
            $region35: #{efficient_net_forward.1} parent=31 // pred_region
              // Predicated region
              $region48: #{efficient_net_forward.1} parent=35 // pred_check
                _
              $region49: #{efficient_net_forward.1} parent=35 // pred_check_branch
                %489 = sbr.rel (0) target = $region51
              $region50: #{efficient_net_forward.1} parent=35 // pred_region
                loop: start=0, step=1, limit=1
                $region52: #{efficient_net_forward.1} parent=50 // loop_pre_header
                  _
                $region53: #{efficient_net_forward.1} parent=50 // loop_header
                  %s491 = sphi 0, %s495
                  %p492 = scmp.ge.s32.totalorder %s491, 1
                  %s496 = sphi %s216, %s216
                  %s497 = sphi %s213, %s213
                $region54: #{efficient_net_forward.1} parent=50 // loop_header_branch
                  %494 = sbr.rel (%p492) target = $region58
                $region55: #{efficient_net_forward.1} parent=50 // loop_body
                  %v498 = vld [vmem:[%s496] sm:$0xff]
                  %499 = vst [vmem:[%s497] sm:$0xff] %v498
                  %v500 = vld [vmem:[%s496 + $0x30] sm:$0xff]
                  %501 = vst [vmem:[%s497 + $0x8] sm:$0xff] %v500
                  %v502 = vld [vmem:[%s496 + $0x60] sm:$0xff]
                  %503 = vst [vmem:[%s497 + $0x10] sm:$0xff] %v502
                  %v504 = vld [vmem:[%s496 + $0x90] sm:$0xff]
                  %505 = vst [vmem:[%s497 + $0x18] sm:$0xff] %v504
                  %v506 = vld [vmem:[%s496 + $0xc0] sm:$0xff]
                  %507 = vst [vmem:[%s497 + $0x20] sm:$0xff] %v506
                  %v508 = vld [vmem:[%s496 + $0xf0] sm:$0xff]
                  %509 = vst [vmem:[%s497 + $0x28] sm:$0xff] %v508
                  %v510 = vld [vmem:[%s496 + $0x120] sm:$0xff]
                  %511 = vst [vmem:[%s497 + $0x30] sm:$0xff] %v510
                  %v512 = vld [vmem:[%s496 + $0x150] sm:$0xff]
                  %513 = vst [vmem:[%s497 + $0x38] sm:$0xff] %v512
                  %v514 = vld [vmem:[%s496 + $0x180] sm:$0xff]
                  %515 = vst [vmem:[%s497 + $0x40] sm:$0xff] %v514
                  %v516 = vld [vmem:[%s496 + $0x1b0] sm:$0xff]
                  %517 = vst [vmem:[%s497 + $0x48] sm:$0xff] %v516
                  %v518 = vld [vmem:[%s496 + $0x1e0] sm:$0xff]
                  %519 = vst [vmem:[%s497 + $0x50] sm:$0xff] %v518
                  %v520 = vld [vmem:[%s496 + $0x210] sm:$0xff]
                  %521 = vst [vmem:[%s497 + $0x58] sm:$0xff] %v520
                  %v522 = vld [vmem:[%s496 + $0x240] sm:$0xff]
                  %523 = vst [vmem:[%s497 + $0x60] sm:$0xff] %v522
                  %v524 = vld [vmem:[%s496 + $0x270] sm:$0xff]
                  %525 = vst [vmem:[%s497 + $0x68] sm:$0xff] %v524
                  %v526 = vld [vmem:[%s496 + $0x2a0] sm:$0xff]
                  %527 = vst [vmem:[%s497 + $0x70] sm:$0xff] %v526
                  %v528 = vld [vmem:[%s496 + $0x2d0] sm:$0xff]
                  %529 = vst [vmem:[%s497 + $0x78] sm:$0xff] %v528
                  %v530 = vld [vmem:[%s496 + $0x300] sm:$0xff]
                  %531 = vst [vmem:[%s497 + $0x80] sm:$0xff] %v530
                  %v532 = vld [vmem:[%s496 + $0x330] sm:$0xff]
                  %533 = vst [vmem:[%s497 + $0x88] sm:$0xff] %v532
                  %v534 = vld [vmem:[%s496 + $0x360] sm:$0xff]
                  %535 = vst [vmem:[%s497 + $0x90] sm:$0xff] %v534
                  %v536 = vld [vmem:[%s496 + $0x390] sm:$0xff]
                  %537 = vst [vmem:[%s497 + $0x98] sm:$0xff] %v536
                  %v538 = vld [vmem:[%s496 + $0x3c0] sm:$0xff]
                  %539 = vst [vmem:[%s497 + $0xa0] sm:$0xff] %v538
                  %v540 = vld [vmem:[%s496 + $0x3f0] sm:$0xff]
                  %541 = vst [vmem:[%s497 + $0xa8] sm:$0xff] %v540
                  %v542 = vld [vmem:[%s496 + $0x420] sm:$0xff]
                  %543 = vst [vmem:[%s497 + $0xb0] sm:$0xff] %v542
                  %v544 = vld [vmem:[%s496 + $0x450] sm:$0xff]
                  %545 = vst [vmem:[%s497 + $0xb8] sm:$0xff] %v544
                  %v546 = vld [vmem:[%s496 + $0x480] sm:$0xff]
                  %547 = vst [vmem:[%s497 + $0xc0] sm:$0xff] %v546
                  %v548 = vld [vmem:[%s496 + $0x4b0] sm:$0xff]
                  %549 = vst [vmem:[%s497 + $0xc8] sm:$0xff] %v548
                  %v550 = vld [vmem:[%s496 + $0x4e0] sm:$0xff]
                  %551 = vst [vmem:[%s497 + $0xd0] sm:$0xff] %v550
                  %v552 = vld [vmem:[%s496 + $0x510] sm:$0xff]
                  %553 = vst [vmem:[%s497 + $0xd8] sm:$0xff] %v552
                  %v554 = vld [vmem:[%s496 + $0x540] sm:$0xff]
                  %555 = vst [vmem:[%s497 + $0xe0] sm:$0xff] %v554
                  %v556 = vld [vmem:[%s496 + $0x570] sm:$0xff]
                  %557 = vst [vmem:[%s497 + $0xe8] sm:$0xff] %v556
                  %v558 = vld [vmem:[%s496 + $0x5a0] sm:$0xff]
                  %559 = vst [vmem:[%s497 + $0xf0] sm:$0xff] %v558
                  %v560 = vld [vmem:[%s496 + $0x5d0] sm:$0xff]
                  %561 = vst [vmem:[%s497 + $0xf8] sm:$0xff] %v560
                  %v562 = vld [vmem:[%s496 + $0x600] sm:$0xff]
                  %563 = vst [vmem:[%s497 + $0x100] sm:$0xff] %v562
                  %v564 = vld [vmem:[%s496 + $0x630] sm:$0xff]
                  %565 = vst [vmem:[%s497 + $0x108] sm:$0xff] %v564
                  %v566 = vld [vmem:[%s496 + $0x660] sm:$0xff]
                  %567 = vst [vmem:[%s497 + $0x110] sm:$0xff] %v566
                  %v568 = vld [vmem:[%s496 + $0x690] sm:$0xff]
                  %569 = vst [vmem:[%s497 + $0x118] sm:$0xff] %v568
                  %v570 = vld [vmem:[%s496 + $0x6c0] sm:$0xff]
                  %571 = vst [vmem:[%s497 + $0x120] sm:$0xff] %v570
                  %v572 = vld [vmem:[%s496 + $0x6f0] sm:$0xff]
                  %573 = vst [vmem:[%s497 + $0x128] sm:$0xff] %v572
                  %v574 = vld [vmem:[%s496 + $0x720] sm:$0xff]
                  %575 = vst [vmem:[%s497 + $0x130] sm:$0xff] %v574
                  %v576 = vld [vmem:[%s496 + $0x750] sm:$0xff]
                  %577 = vst [vmem:[%s497 + $0x138] sm:$0xff] %v576
                  %v578 = vld [vmem:[%s496 + $0x780] sm:$0xff]
                  %579 = vst [vmem:[%s497 + $0x140] sm:$0xff] %v578
                  %v580 = vld [vmem:[%s496 + $0x7b0] sm:$0xff]
                  %581 = vst [vmem:[%s497 + $0x148] sm:$0xff] %v580
                  %v582 = vld [vmem:[%s496 + $0x7e0] sm:$0xff]
                  %583 = vst [vmem:[%s497 + $0x150] sm:$0xff] %v582
                  %v584 = vld [vmem:[%s496 + $0x810] sm:$0xff]
                  %585 = vst [vmem:[%s497 + $0x158] sm:$0xff] %v584
                  %v586 = vld [vmem:[%s496 + $0x840] sm:$0xff]
                  %587 = vst [vmem:[%s497 + $0x160] sm:$0xff] %v586
                  %v588 = vld [vmem:[%s496 + $0x870] sm:$0xff]
                  %589 = vst [vmem:[%s497 + $0x168] sm:$0xff] %v588
                  %v590 = vld [vmem:[%s496 + $0x8a0] sm:$0xff]
                  %591 = vst [vmem:[%s497 + $0x170] sm:$0xff] %v590
                  %v592 = vld [vmem:[%s496 + $0x8d0] sm:$0xff]
                  %593 = vst [vmem:[%s497 + $0x178] sm:$0xff] %v592
                  %v594 = vld [vmem:[%s496 + $0x900] sm:$0xff]
                  %595 = vst [vmem:[%s497 + $0x180] sm:$0xff] %v594
                  %v596 = vld [vmem:[%s496 + $0x930] sm:$0xff]
                  %597 = vst [vmem:[%s497 + $0x188] sm:$0xff] %v596
                  %v598 = vld [vmem:[%s496 + $0x960] sm:$0xff]
                  %599 = vst [vmem:[%s497 + $0x190] sm:$0xff] %v598
                  %v600 = vld [vmem:[%s496 + $0x990] sm:$0xff]
                  %601 = vst [vmem:[%s497 + $0x198] sm:$0xff] %v600
                  %v602 = vld [vmem:[%s496 + $0x9c0] sm:$0xff]
                  %603 = vst [vmem:[%s497 + $0x1a0] sm:$0xff] %v602
                  %v604 = vld [vmem:[%s496 + $0x9f0] sm:$0xff]
                  %605 = vst [vmem:[%s497 + $0x1a8] sm:$0xff] %v604
                  %v606 = vld [vmem:[%s496 + $0xa20] sm:$0xff]
                  %607 = vst [vmem:[%s497 + $0x1b0] sm:$0xff] %v606
                  %v608 = vld [vmem:[%s496 + $0xa50] sm:$0xff]
                  %609 = vst [vmem:[%s497 + $0x1b8] sm:$0xff] %v608
                  %v610 = vld [vmem:[%s496 + $0xa80] sm:$0xff]
                  %611 = vst [vmem:[%s497 + $0x1c0] sm:$0xff] %v610
                  %v612 = vld [vmem:[%s496 + $0xab0] sm:$0xff]
                  %613 = vst [vmem:[%s497 + $0x1c8] sm:$0xff] %v612
                  %v614 = vld [vmem:[%s496 + $0xae0] sm:$0xff]
                  %615 = vst [vmem:[%s497 + $0x1d0] sm:$0xff] %v614
                  %v616 = vld [vmem:[%s496 + $0xb10] sm:$0xff]
                  %617 = vst [vmem:[%s497 + $0x1d8] sm:$0xff] %v616
                  %v618 = vld [vmem:[%s496 + $0xb40] sm:$0xff]
                  %619 = vst [vmem:[%s497 + $0x1e0] sm:$0xff] %v618
                  %v620 = vld [vmem:[%s496 + $0xb70] sm:$0xff]
                  %621 = vst [vmem:[%s497 + $0x1e8] sm:$0xff] %v620
                  %v622 = vld [vmem:[%s496 + $0xba0] sm:$0xff]
                  %623 = vst [vmem:[%s497 + $0x1f0] sm:$0xff] %v622
                  %v624 = vld [vmem:[%s496 + $0xbd0] sm:$0xff]
                  %625 = vst [vmem:[%s497 + $0x1f8] sm:$0xff] %v624
                  %v626 = vld [vmem:[%s496 + $0xc00] sm:$0xff]
                  %627 = vst [vmem:[%s497 + $0x200] sm:$0xff] %v626
                  %v628 = vld [vmem:[%s496 + $0xc30] sm:$0xff]
                  %629 = vst [vmem:[%s497 + $0x208] sm:$0xff] %v628
                  %v630 = vld [vmem:[%s496 + $0xc60] sm:$0xff]
                  %631 = vst [vmem:[%s497 + $0x210] sm:$0xff] %v630
                  %v632 = vld [vmem:[%s496 + $0xc90] sm:$0xff]
                  %633 = vst [vmem:[%s497 + $0x218] sm:$0xff] %v632
                  %v634 = vld [vmem:[%s496 + $0xcc0] sm:$0xff]
                  %635 = vst [vmem:[%s497 + $0x220] sm:$0xff] %v634
                  %v636 = vld [vmem:[%s496 + $0xcf0] sm:$0xff]
                  %637 = vst [vmem:[%s497 + $0x228] sm:$0xff] %v636
                  %v638 = vld [vmem:[%s496 + $0xd20] sm:$0xff]
                  %639 = vst [vmem:[%s497 + $0x230] sm:$0xff] %v638
                  %v640 = vld [vmem:[%s496 + $0xd50] sm:$0xff]
                  %641 = vst [vmem:[%s497 + $0x238] sm:$0xff] %v640
                  %v642 = vld [vmem:[%s496 + $0xd80] sm:$0xff]
                  %643 = vst [vmem:[%s497 + $0x240] sm:$0xff] %v642
                  %v644 = vld [vmem:[%s496 + $0xdb0] sm:$0xff]
                  %645 = vst [vmem:[%s497 + $0x248] sm:$0xff] %v644
                  %v646 = vld [vmem:[%s496 + $0xde0] sm:$0xff]
                  %647 = vst [vmem:[%s497 + $0x250] sm:$0xff] %v646
                  %v648 = vld [vmem:[%s496 + $0xe10] sm:$0xff]
                  %649 = vst [vmem:[%s497 + $0x258] sm:$0xff] %v648
                  %v650 = vld [vmem:[%s496 + $0xe40] sm:$0xff]
                  %651 = vst [vmem:[%s497 + $0x260] sm:$0xff] %v650
                  %v652 = vld [vmem:[%s496 + $0xe70] sm:$0xff]
                  %653 = vst [vmem:[%s497 + $0x268] sm:$0xff] %v652
                  %v654 = vld [vmem:[%s496 + $0xea0] sm:$0xff]
                  %655 = vst [vmem:[%s497 + $0x270] sm:$0xff] %v654
                  %v656 = vld [vmem:[%s496 + $0xed0] sm:$0xff]
                  %657 = vst [vmem:[%s497 + $0x278] sm:$0xff] %v656
                  %v658 = vld [vmem:[%s496 + $0xf00] sm:$0xff]
                  %659 = vst [vmem:[%s497 + $0x280] sm:$0xff] %v658
                  %v660 = vld [vmem:[%s496 + $0xf30] sm:$0xff]
                  %661 = vst [vmem:[%s497 + $0x288] sm:$0xff] %v660
                  %v662 = vld [vmem:[%s496 + $0xf60] sm:$0xff]
                  %663 = vst [vmem:[%s497 + $0x290] sm:$0xff] %v662
                  %v664 = vld [vmem:[%s496 + $0xf90] sm:$0xff]
                  %665 = vst [vmem:[%s497 + $0x298] sm:$0xff] %v664
                  %v666 = vld [vmem:[%s496 + $0xfc0] sm:$0xff]
                  %667 = vst [vmem:[%s497 + $0x2a0] sm:$0xff] %v666
                  %v668 = vld [vmem:[%s496 + $0xff0] sm:$0xff]
                  %669 = vst [vmem:[%s497 + $0x2a8] sm:$0xff] %v668
                  %v670 = vld [vmem:[%s496 + $0x1020] sm:$0xff]
                  %671 = vst [vmem:[%s497 + $0x2b0] sm:$0xff] %v670
                  %v672 = vld [vmem:[%s496 + $0x1050] sm:$0xff]
                  %673 = vst [vmem:[%s497 + $0x2b8] sm:$0xff] %v672
                  %v674 = vld [vmem:[%s496 + $0x1080] sm:$0xff]
                  %675 = vst [vmem:[%s497 + $0x2c0] sm:$0xff] %v674
                  %v676 = vld [vmem:[%s496 + $0x10b0] sm:$0xff]
                  %677 = vst [vmem:[%s497 + $0x2c8] sm:$0xff] %v676
                  %v678 = vld [vmem:[%s496 + $0x10e0] sm:$0xff]
                  %679 = vst [vmem:[%s497 + $0x2d0] sm:$0xff] %v678
                  %v680 = vld [vmem:[%s496 + $0x1110] sm:$0xff]
                  %681 = vst [vmem:[%s497 + $0x2d8] sm:$0xff] %v680
                  %v682 = vld [vmem:[%s496 + $0x1140] sm:$0xff]
                  %683 = vst [vmem:[%s497 + $0x2e0] sm:$0xff] %v682
                  %v684 = vld [vmem:[%s496 + $0x1170] sm:$0xff]
                  %685 = vst [vmem:[%s497 + $0x2e8] sm:$0xff] %v684
                  %v686 = vld [vmem:[%s496 + $0x11a0] sm:$0xff]
                  %687 = vst [vmem:[%s497 + $0x2f0] sm:$0xff] %v686
                  %v688 = vld [vmem:[%s496 + $0x11d0] sm:$0xff]
                  %689 = vst [vmem:[%s497 + $0x2f8] sm:$0xff] %v688
                  %v690 = vld [vmem:[%s496 + $0x1200] sm:$0xff]
                  %691 = vst [vmem:[%s497 + $0x300] sm:$0xff] %v690
                  %v692 = vld [vmem:[%s496 + $0x1230] sm:$0xff]
                  %693 = vst [vmem:[%s497 + $0x308] sm:$0xff] %v692
                  %v694 = vld [vmem:[%s496 + $0x1260] sm:$0xff]
                  %695 = vst [vmem:[%s497 + $0x310] sm:$0xff] %v694
                  %v696 = vld [vmem:[%s496 + $0x1290] sm:$0xff]
                  %697 = vst [vmem:[%s497 + $0x318] sm:$0xff] %v696
                  %v698 = vld [vmem:[%s496 + $0x12c0] sm:$0xff]
                  %699 = vst [vmem:[%s497 + $0x320] sm:$0xff] %v698
                  %v700 = vld [vmem:[%s496 + $0x12f0] sm:$0xff]
                  %701 = vst [vmem:[%s497 + $0x328] sm:$0xff] %v700
                  %v702 = vld [vmem:[%s496 + $0x1320] sm:$0xff]
                  %703 = vst [vmem:[%s497 + $0x330] sm:$0xff] %v702
                  %v704 = vld [vmem:[%s496 + $0x1350] sm:$0xff]
                  %705 = vst [vmem:[%s497 + $0x338] sm:$0xff] %v704
                  %v706 = vld [vmem:[%s496 + $0x1380] sm:$0xff]
                  %707 = vst [vmem:[%s497 + $0x340] sm:$0xff] %v706
                  %v708 = vld [vmem:[%s496 + $0x13b0] sm:$0xff]
                  %709 = vst [vmem:[%s497 + $0x348] sm:$0xff] %v708
                  %v710 = vld [vmem:[%s496 + $0x13e0] sm:$0xff]
                  %711 = vst [vmem:[%s497 + $0x350] sm:$0xff] %v710
                  %v712 = vld [vmem:[%s496 + $0x1410] sm:$0xff]
                  %713 = vst [vmem:[%s497 + $0x358] sm:$0xff] %v712
                  %v714 = vld [vmem:[%s496 + $0x1440] sm:$0xff]
                  %715 = vst [vmem:[%s497 + $0x360] sm:$0xff] %v714
                  %v716 = vld [vmem:[%s496 + $0x1470] sm:$0xff]
                  %717 = vst [vmem:[%s497 + $0x368] sm:$0xff] %v716
                  %v718 = vld [vmem:[%s496 + $0x14a0] sm:$0xff]
                  %719 = vst [vmem:[%s497 + $0x370] sm:$0xff] %v718
                  %v720 = vld [vmem:[%s496 + $0x14d0] sm:$0xff]
                  %721 = vst [vmem:[%s497 + $0x378] sm:$0xff] %v720
                  %v722 = vld [vmem:[%s496 + $0x1500] sm:$0xff]
                  %723 = vst [vmem:[%s497 + $0x380] sm:$0xff] %v722
                  %v724 = vld [vmem:[%s496 + $0x1530] sm:$0xff]
                  %725 = vst [vmem:[%s497 + $0x388] sm:$0xff] %v724
                  %v726 = vld [vmem:[%s496 + $0x1560] sm:$0xff]
                  %727 = vst [vmem:[%s497 + $0x390] sm:$0xff] %v726
                  %v728 = vld [vmem:[%s496 + $0x1590] sm:$0xff]
                  %729 = vst [vmem:[%s497 + $0x398] sm:$0xff] %v728
                  %v730 = vld [vmem:[%s496 + $0x15c0] sm:$0xff]
                  %731 = vst [vmem:[%s497 + $0x3a0] sm:$0xff] %v730
                  %v732 = vld [vmem:[%s496 + $0x15f0] sm:$0xff]
                  %733 = vst [vmem:[%s497 + $0x3a8] sm:$0xff] %v732
                  %v734 = vld [vmem:[%s496 + $0x1620] sm:$0xff]
                  %735 = vst [vmem:[%s497 + $0x3b0] sm:$0xff] %v734
                  %v736 = vld [vmem:[%s496 + $0x1650] sm:$0xff]
                  %737 = vst [vmem:[%s497 + $0x3b8] sm:$0xff] %v736
                  %v738 = vld [vmem:[%s496 + $0x1680] sm:$0xff]
                  %739 = vst [vmem:[%s497 + $0x3c0] sm:$0xff] %v738
                  %v740 = vld [vmem:[%s496 + $0x16b0] sm:$0xff]
                  %741 = vst [vmem:[%s497 + $0x3c8] sm:$0xff] %v740
                  %v742 = vld [vmem:[%s496 + $0x16e0] sm:$0xff]
                  %743 = vst [vmem:[%s497 + $0x3d0] sm:$0xff] %v742
                  %v744 = vld [vmem:[%s496 + $0x1710] sm:$0xff]
                  %745 = vst [vmem:[%s497 + $0x3d8] sm:$0xff] %v744
                  %v746 = vld [vmem:[%s496 + $0x1740] sm:$0xff]
                  %747 = vst [vmem:[%s497 + $0x3e0] sm:$0xff] %v746
                  %v748 = vld [vmem:[%s496 + $0x1770] sm:$0xff]
                  %749 = vst [vmem:[%s497 + $0x3e8] sm:$0xff] %v748
                  %v750 = vld [vmem:[%s496 + $0x17a0] sm:$0xff]
                  %751 = vst [vmem:[%s497 + $0x3f0] sm:$0xff] %v750
                  %v752 = vld [vmem:[%s496 + $0x17d0] sm:$0xff]
                  %753 = vst [vmem:[%s497 + $0x3f8] sm:$0xff] %v752
                $region56: #{efficient_net_forward.1} parent=50 // loop_footer
                  %s495 = sadd.s32 1, %s491
                $region57: #{efficient_net_forward.1} parent=50 // loop_footer_branch
                  %490 = sbr.rel target = $region53
                $region58: #{efficient_net_forward.1} parent=50 // loop_exit
                  _
              $region51: #{efficient_net_forward.1} parent=35 // pred_fallthru
                _
              // Predicated region
              $region59: #{efficient_net_forward.1} parent=35 // pred_check
                _
              $region60: #{efficient_net_forward.1} parent=35 // pred_check_branch
                %755 = sbr.rel target = $region62
              $region61: #{efficient_net_forward.1} parent=35 // pred_region
                _
              $region62: #{efficient_net_forward.1} parent=35 // pred_fallthru
                _
            $region36: #{efficient_net_forward.1} parent=31 // pred_fallthru
              _
            // Predicated region
            $region37: #{efficient_net_forward.1} parent=31 // pred_check
              _
            $region38: #{efficient_net_forward.1} parent=31 // pred_check_branch
              %222 = sbr.rel target = $region40
            $region39: #{efficient_net_forward.1} parent=31 // pred_region
              loop: start=0, step=1, limit=1
              $region41: #{efficient_net_forward.1} parent=39 // loop_pre_header
                _
              $region42: #{efficient_net_forward.1} parent=39 // loop_header
                %s225 = sphi 0, %s229
                %p226 = scmp.ge.s32.totalorder %s225, 1
                %s230 = sphi %s216, %s216
                %s231 = sphi %s213, %s213
              $region43: #{efficient_net_forward.1} parent=39 // loop_header_branch
                %228 = sbr.rel (%p226) target = $region47
              $region44: #{efficient_net_forward.1} parent=39 // loop_body
                %v232 = vld [vmem:[%s230] sm:$0xff]
                %233 = vst [vmem:[%s231] sm:$0xff] %v232
                %v234 = vld [vmem:[%s230 + $0x30] sm:$0xff]
                %235 = vst [vmem:[%s231 + $0x8] sm:$0xff] %v234
                %v236 = vld [vmem:[%s230 + $0x60] sm:$0xff]
                %237 = vst [vmem:[%s231 + $0x10] sm:$0xff] %v236
                %v238 = vld [vmem:[%s230 + $0x90] sm:$0xff]
                %239 = vst [vmem:[%s231 + $0x18] sm:$0xff] %v238
                %v240 = vld [vmem:[%s230 + $0xc0] sm:$0xff]
                %241 = vst [vmem:[%s231 + $0x20] sm:$0xff] %v240
                %v242 = vld [vmem:[%s230 + $0xf0] sm:$0xff]
                %243 = vst [vmem:[%s231 + $0x28] sm:$0xff] %v242
                %v244 = vld [vmem:[%s230 + $0x120] sm:$0xff]
                %245 = vst [vmem:[%s231 + $0x30] sm:$0xff] %v244
                %v246 = vld [vmem:[%s230 + $0x150] sm:$0xff]
                %247 = vst [vmem:[%s231 + $0x38] sm:$0xff] %v246
                %v248 = vld [vmem:[%s230 + $0x180] sm:$0xff]
                %249 = vst [vmem:[%s231 + $0x40] sm:$0xff] %v248
                %v250 = vld [vmem:[%s230 + $0x1b0] sm:$0xff]
                %251 = vst [vmem:[%s231 + $0x48] sm:$0xff] %v250
                %v252 = vld [vmem:[%s230 + $0x1e0] sm:$0xff]
                %253 = vst [vmem:[%s231 + $0x50] sm:$0xff] %v252
                %v254 = vld [vmem:[%s230 + $0x210] sm:$0xff]
                %255 = vst [vmem:[%s231 + $0x58] sm:$0xff] %v254
                %v256 = vld [vmem:[%s230 + $0x240] sm:$0xff]
                %257 = vst [vmem:[%s231 + $0x60] sm:$0xff] %v256
                %v258 = vld [vmem:[%s230 + $0x270] sm:$0xff]
                %259 = vst [vmem:[%s231 + $0x68] sm:$0xff] %v258
                %v260 = vld [vmem:[%s230 + $0x2a0] sm:$0xff]
                %261 = vst [vmem:[%s231 + $0x70] sm:$0xff] %v260
                %v262 = vld [vmem:[%s230 + $0x2d0] sm:$0xff]
                %263 = vst [vmem:[%s231 + $0x78] sm:$0xff] %v262
                %v264 = vld [vmem:[%s230 + $0x300] sm:$0xff]
                %265 = vst [vmem:[%s231 + $0x80] sm:$0xff] %v264
                %v266 = vld [vmem:[%s230 + $0x330] sm:$0xff]
                %267 = vst [vmem:[%s231 + $0x88] sm:$0xff] %v266
                %v268 = vld [vmem:[%s230 + $0x360] sm:$0xff]
                %269 = vst [vmem:[%s231 + $0x90] sm:$0xff] %v268
                %v270 = vld [vmem:[%s230 + $0x390] sm:$0xff]
                %271 = vst [vmem:[%s231 + $0x98] sm:$0xff] %v270
                %v272 = vld [vmem:[%s230 + $0x3c0] sm:$0xff]
                %273 = vst [vmem:[%s231 + $0xa0] sm:$0xff] %v272
                %v274 = vld [vmem:[%s230 + $0x3f0] sm:$0xff]
                %275 = vst [vmem:[%s231 + $0xa8] sm:$0xff] %v274
                %v276 = vld [vmem:[%s230 + $0x420] sm:$0xff]
                %277 = vst [vmem:[%s231 + $0xb0] sm:$0xff] %v276
                %v278 = vld [vmem:[%s230 + $0x450] sm:$0xff]
                %279 = vst [vmem:[%s231 + $0xb8] sm:$0xff] %v278
                %v280 = vld [vmem:[%s230 + $0x480] sm:$0xff]
                %281 = vst [vmem:[%s231 + $0xc0] sm:$0xff] %v280
                %v282 = vld [vmem:[%s230 + $0x4b0] sm:$0xff]
                %283 = vst [vmem:[%s231 + $0xc8] sm:$0xff] %v282
                %v284 = vld [vmem:[%s230 + $0x4e0] sm:$0xff]
                %285 = vst [vmem:[%s231 + $0xd0] sm:$0xff] %v284
                %v286 = vld [vmem:[%s230 + $0x510] sm:$0xff]
                %287 = vst [vmem:[%s231 + $0xd8] sm:$0xff] %v286
                %v288 = vld [vmem:[%s230 + $0x540] sm:$0xff]
                %289 = vst [vmem:[%s231 + $0xe0] sm:$0xff] %v288
                %v290 = vld [vmem:[%s230 + $0x570] sm:$0xff]
                %291 = vst [vmem:[%s231 + $0xe8] sm:$0xff] %v290
                %v292 = vld [vmem:[%s230 + $0x5a0] sm:$0xff]
                %293 = vst [vmem:[%s231 + $0xf0] sm:$0xff] %v292
                %v294 = vld [vmem:[%s230 + $0x5d0] sm:$0xff]
                %295 = vst [vmem:[%s231 + $0xf8] sm:$0xff] %v294
                %v296 = vld [vmem:[%s230 + $0x600] sm:$0xff]
                %297 = vst [vmem:[%s231 + $0x100] sm:$0xff] %v296
                %v298 = vld [vmem:[%s230 + $0x630] sm:$0xff]
                %299 = vst [vmem:[%s231 + $0x108] sm:$0xff] %v298
                %v300 = vld [vmem:[%s230 + $0x660] sm:$0xff]
                %301 = vst [vmem:[%s231 + $0x110] sm:$0xff] %v300
                %v302 = vld [vmem:[%s230 + $0x690] sm:$0xff]
                %303 = vst [vmem:[%s231 + $0x118] sm:$0xff] %v302
                %v304 = vld [vmem:[%s230 + $0x6c0] sm:$0xff]
                %305 = vst [vmem:[%s231 + $0x120] sm:$0xff] %v304
                %v306 = vld [vmem:[%s230 + $0x6f0] sm:$0xff]
                %307 = vst [vmem:[%s231 + $0x128] sm:$0xff] %v306
                %v308 = vld [vmem:[%s230 + $0x720] sm:$0xff]
                %309 = vst [vmem:[%s231 + $0x130] sm:$0xff] %v308
                %v310 = vld [vmem:[%s230 + $0x750] sm:$0xff]
                %311 = vst [vmem:[%s231 + $0x138] sm:$0xff] %v310
                %v312 = vld [vmem:[%s230 + $0x780] sm:$0xff]
                %313 = vst [vmem:[%s231 + $0x140] sm:$0xff] %v312
                %v314 = vld [vmem:[%s230 + $0x7b0] sm:$0xff]
                %315 = vst [vmem:[%s231 + $0x148] sm:$0xff] %v314
                %v316 = vld [vmem:[%s230 + $0x7e0] sm:$0xff]
                %317 = vst [vmem:[%s231 + $0x150] sm:$0xff] %v316
                %v318 = vld [vmem:[%s230 + $0x810] sm:$0xff]
                %319 = vst [vmem:[%s231 + $0x158] sm:$0xff] %v318
                %v320 = vld [vmem:[%s230 + $0x840] sm:$0xff]
                %321 = vst [vmem:[%s231 + $0x160] sm:$0xff] %v320
                %v322 = vld [vmem:[%s230 + $0x870] sm:$0xff]
                %323 = vst [vmem:[%s231 + $0x168] sm:$0xff] %v322
                %v324 = vld [vmem:[%s230 + $0x8a0] sm:$0xff]
                %325 = vst [vmem:[%s231 + $0x170] sm:$0xff] %v324
                %v326 = vld [vmem:[%s230 + $0x8d0] sm:$0xff]
                %327 = vst [vmem:[%s231 + $0x178] sm:$0xff] %v326
                %v328 = vld [vmem:[%s230 + $0x900] sm:$0xff]
                %329 = vst [vmem:[%s231 + $0x180] sm:$0xff] %v328
                %v330 = vld [vmem:[%s230 + $0x930] sm:$0xff]
                %331 = vst [vmem:[%s231 + $0x188] sm:$0xff] %v330
                %v332 = vld [vmem:[%s230 + $0x960] sm:$0xff]
                %333 = vst [vmem:[%s231 + $0x190] sm:$0xff] %v332
                %v334 = vld [vmem:[%s230 + $0x990] sm:$0xff]
                %335 = vst [vmem:[%s231 + $0x198] sm:$0xff] %v334
                %v336 = vld [vmem:[%s230 + $0x9c0] sm:$0xff]
                %337 = vst [vmem:[%s231 + $0x1a0] sm:$0xff] %v336
                %v338 = vld [vmem:[%s230 + $0x9f0] sm:$0xff]
                %339 = vst [vmem:[%s231 + $0x1a8] sm:$0xff] %v338
                %v340 = vld [vmem:[%s230 + $0xa20] sm:$0xff]
                %341 = vst [vmem:[%s231 + $0x1b0] sm:$0xff] %v340
                %v342 = vld [vmem:[%s230 + $0xa50] sm:$0xff]
                %343 = vst [vmem:[%s231 + $0x1b8] sm:$0xff] %v342
                %v344 = vld [vmem:[%s230 + $0xa80] sm:$0xff]
                %345 = vst [vmem:[%s231 + $0x1c0] sm:$0xff] %v344
                %v346 = vld [vmem:[%s230 + $0xab0] sm:$0xff]
                %347 = vst [vmem:[%s231 + $0x1c8] sm:$0xff] %v346
                %v348 = vld [vmem:[%s230 + $0xae0] sm:$0xff]
                %349 = vst [vmem:[%s231 + $0x1d0] sm:$0xff] %v348
                %v350 = vld [vmem:[%s230 + $0xb10] sm:$0xff]
                %351 = vst [vmem:[%s231 + $0x1d8] sm:$0xff] %v350
                %v352 = vld [vmem:[%s230 + $0xb40] sm:$0xff]
                %353 = vst [vmem:[%s231 + $0x1e0] sm:$0xff] %v352
                %v354 = vld [vmem:[%s230 + $0xb70] sm:$0xff]
                %355 = vst [vmem:[%s231 + $0x1e8] sm:$0xff] %v354
                %v356 = vld [vmem:[%s230 + $0xba0] sm:$0xff]
                %357 = vst [vmem:[%s231 + $0x1f0] sm:$0xff] %v356
                %v358 = vld [vmem:[%s230 + $0xbd0] sm:$0xff]
                %359 = vst [vmem:[%s231 + $0x1f8] sm:$0xff] %v358
                %v360 = vld [vmem:[%s230 + $0xc00] sm:$0xff]
                %361 = vst [vmem:[%s231 + $0x200] sm:$0xff] %v360
                %v362 = vld [vmem:[%s230 + $0xc30] sm:$0xff]
                %363 = vst [vmem:[%s231 + $0x208] sm:$0xff] %v362
                %v364 = vld [vmem:[%s230 + $0xc60] sm:$0xff]
                %365 = vst [vmem:[%s231 + $0x210] sm:$0xff] %v364
                %v366 = vld [vmem:[%s230 + $0xc90] sm:$0xff]
                %367 = vst [vmem:[%s231 + $0x218] sm:$0xff] %v366
                %v368 = vld [vmem:[%s230 + $0xcc0] sm:$0xff]
                %369 = vst [vmem:[%s231 + $0x220] sm:$0xff] %v368
                %v370 = vld [vmem:[%s230 + $0xcf0] sm:$0xff]
                %371 = vst [vmem:[%s231 + $0x228] sm:$0xff] %v370
                %v372 = vld [vmem:[%s230 + $0xd20] sm:$0xff]
                %373 = vst [vmem:[%s231 + $0x230] sm:$0xff] %v372
                %v374 = vld [vmem:[%s230 + $0xd50] sm:$0xff]
                %375 = vst [vmem:[%s231 + $0x238] sm:$0xff] %v374
                %v376 = vld [vmem:[%s230 + $0xd80] sm:$0xff]
                %377 = vst [vmem:[%s231 + $0x240] sm:$0xff] %v376
                %v378 = vld [vmem:[%s230 + $0xdb0] sm:$0xff]
                %379 = vst [vmem:[%s231 + $0x248] sm:$0xff] %v378
                %v380 = vld [vmem:[%s230 + $0xde0] sm:$0xff]
                %381 = vst [vmem:[%s231 + $0x250] sm:$0xff] %v380
                %v382 = vld [vmem:[%s230 + $0xe10] sm:$0xff]
                %383 = vst [vmem:[%s231 + $0x258] sm:$0xff] %v382
                %v384 = vld [vmem:[%s230 + $0xe40] sm:$0xff]
                %385 = vst [vmem:[%s231 + $0x260] sm:$0xff] %v384
                %v386 = vld [vmem:[%s230 + $0xe70] sm:$0xff]
                %387 = vst [vmem:[%s231 + $0x268] sm:$0xff] %v386
                %v388 = vld [vmem:[%s230 + $0xea0] sm:$0xff]
                %389 = vst [vmem:[%s231 + $0x270] sm:$0xff] %v388
                %v390 = vld [vmem:[%s230 + $0xed0] sm:$0xff]
                %391 = vst [vmem:[%s231 + $0x278] sm:$0xff] %v390
                %v392 = vld [vmem:[%s230 + $0xf00] sm:$0xff]
                %393 = vst [vmem:[%s231 + $0x280] sm:$0xff] %v392
                %v394 = vld [vmem:[%s230 + $0xf30] sm:$0xff]
                %395 = vst [vmem:[%s231 + $0x288] sm:$0xff] %v394
                %v396 = vld [vmem:[%s230 + $0xf60] sm:$0xff]
                %397 = vst [vmem:[%s231 + $0x290] sm:$0xff] %v396
                %v398 = vld [vmem:[%s230 + $0xf90] sm:$0xff]
                %399 = vst [vmem:[%s231 + $0x298] sm:$0xff] %v398
                %v400 = vld [vmem:[%s230 + $0xfc0] sm:$0xff]
                %401 = vst [vmem:[%s231 + $0x2a0] sm:$0xff] %v400
                %v402 = vld [vmem:[%s230 + $0xff0] sm:$0xff]
                %403 = vst [vmem:[%s231 + $0x2a8] sm:$0xff] %v402
                %v404 = vld [vmem:[%s230 + $0x1020] sm:$0xff]
                %405 = vst [vmem:[%s231 + $0x2b0] sm:$0xff] %v404
                %v406 = vld [vmem:[%s230 + $0x1050] sm:$0xff]
                %407 = vst [vmem:[%s231 + $0x2b8] sm:$0xff] %v406
                %v408 = vld [vmem:[%s230 + $0x1080] sm:$0xff]
                %409 = vst [vmem:[%s231 + $0x2c0] sm:$0xff] %v408
                %v410 = vld [vmem:[%s230 + $0x10b0] sm:$0xff]
                %411 = vst [vmem:[%s231 + $0x2c8] sm:$0xff] %v410
                %v412 = vld [vmem:[%s230 + $0x10e0] sm:$0xff]
                %413 = vst [vmem:[%s231 + $0x2d0] sm:$0xff] %v412
                %v414 = vld [vmem:[%s230 + $0x1110] sm:$0xff]
                %415 = vst [vmem:[%s231 + $0x2d8] sm:$0xff] %v414
                %v416 = vld [vmem:[%s230 + $0x1140] sm:$0xff]
                %417 = vst [vmem:[%s231 + $0x2e0] sm:$0xff] %v416
                %v418 = vld [vmem:[%s230 + $0x1170] sm:$0xff]
                %419 = vst [vmem:[%s231 + $0x2e8] sm:$0xff] %v418
                %v420 = vld [vmem:[%s230 + $0x11a0] sm:$0xff]
                %421 = vst [vmem:[%s231 + $0x2f0] sm:$0xff] %v420
                %v422 = vld [vmem:[%s230 + $0x11d0] sm:$0xff]
                %423 = vst [vmem:[%s231 + $0x2f8] sm:$0xff] %v422
                %v424 = vld [vmem:[%s230 + $0x1200] sm:$0xff]
                %425 = vst [vmem:[%s231 + $0x300] sm:$0xff] %v424
                %v426 = vld [vmem:[%s230 + $0x1230] sm:$0xff]
                %427 = vst [vmem:[%s231 + $0x308] sm:$0xff] %v426
                %v428 = vld [vmem:[%s230 + $0x1260] sm:$0xff]
                %429 = vst [vmem:[%s231 + $0x310] sm:$0xff] %v428
                %v430 = vld [vmem:[%s230 + $0x1290] sm:$0xff]
                %431 = vst [vmem:[%s231 + $0x318] sm:$0xff] %v430
                %v432 = vld [vmem:[%s230 + $0x12c0] sm:$0xff]
                %433 = vst [vmem:[%s231 + $0x320] sm:$0xff] %v432
                %v434 = vld [vmem:[%s230 + $0x12f0] sm:$0xff]
                %435 = vst [vmem:[%s231 + $0x328] sm:$0xff] %v434
                %v436 = vld [vmem:[%s230 + $0x1320] sm:$0xff]
                %437 = vst [vmem:[%s231 + $0x330] sm:$0xff] %v436
                %v438 = vld [vmem:[%s230 + $0x1350] sm:$0xff]
                %439 = vst [vmem:[%s231 + $0x338] sm:$0xff] %v438
                %v440 = vld [vmem:[%s230 + $0x1380] sm:$0xff]
                %441 = vst [vmem:[%s231 + $0x340] sm:$0xff] %v440
                %v442 = vld [vmem:[%s230 + $0x13b0] sm:$0xff]
                %443 = vst [vmem:[%s231 + $0x348] sm:$0xff] %v442
                %v444 = vld [vmem:[%s230 + $0x13e0] sm:$0xff]
                %445 = vst [vmem:[%s231 + $0x350] sm:$0xff] %v444
                %v446 = vld [vmem:[%s230 + $0x1410] sm:$0xff]
                %447 = vst [vmem:[%s231 + $0x358] sm:$0xff] %v446
                %v448 = vld [vmem:[%s230 + $0x1440] sm:$0xff]
                %449 = vst [vmem:[%s231 + $0x360] sm:$0xff] %v448
                %v450 = vld [vmem:[%s230 + $0x1470] sm:$0xff]
                %451 = vst [vmem:[%s231 + $0x368] sm:$0xff] %v450
                %v452 = vld [vmem:[%s230 + $0x14a0] sm:$0xff]
                %453 = vst [vmem:[%s231 + $0x370] sm:$0xff] %v452
                %v454 = vld [vmem:[%s230 + $0x14d0] sm:$0xff]
                %455 = vst [vmem:[%s231 + $0x378] sm:$0xff] %v454
                %v456 = vld [vmem:[%s230 + $0x1500] sm:$0xff]
                %457 = vst [vmem:[%s231 + $0x380] sm:$0xff] %v456
                %v458 = vld [vmem:[%s230 + $0x1530] sm:$0xff]
                %459 = vst [vmem:[%s231 + $0x388] sm:$0xff] %v458
                %v460 = vld [vmem:[%s230 + $0x1560] sm:$0xff]
                %461 = vst [vmem:[%s231 + $0x390] sm:$0xff] %v460
                %v462 = vld [vmem:[%s230 + $0x1590] sm:$0xff]
                %463 = vst [vmem:[%s231 + $0x398] sm:$0xff] %v462
                %v464 = vld [vmem:[%s230 + $0x15c0] sm:$0xff]
                %465 = vst [vmem:[%s231 + $0x3a0] sm:$0xff] %v464
                %v466 = vld [vmem:[%s230 + $0x15f0] sm:$0xff]
                %467 = vst [vmem:[%s231 + $0x3a8] sm:$0xff] %v466
                %v468 = vld [vmem:[%s230 + $0x1620] sm:$0xff]
                %469 = vst [vmem:[%s231 + $0x3b0] sm:$0xff] %v468
                %v470 = vld [vmem:[%s230 + $0x1650] sm:$0xff]
                %471 = vst [vmem:[%s231 + $0x3b8] sm:$0xff] %v470
                %v472 = vld [vmem:[%s230 + $0x1680] sm:$0xff]
                %473 = vst [vmem:[%s231 + $0x3c0] sm:$0xff] %v472
                %v474 = vld [vmem:[%s230 + $0x16b0] sm:$0xff]
                %475 = vst [vmem:[%s231 + $0x3c8] sm:$0xff] %v474
                %v476 = vld [vmem:[%s230 + $0x16e0] sm:$0xff]
                %477 = vst [vmem:[%s231 + $0x3d0] sm:$0xff] %v476
                %v478 = vld [vmem:[%s230 + $0x1710] sm:$0xff]
                %479 = vst [vmem:[%s231 + $0x3d8] sm:$0xff] %v478
                %v480 = vld [vmem:[%s230 + $0x1740] sm:$0xff]
                %481 = vst [vmem:[%s231 + $0x3e0] sm:$0xff] %v480
                %v482 = vld [vmem:[%s230 + $0x1770] sm:$0xff]
                %483 = vst [vmem:[%s231 + $0x3e8] sm:$0xff] %v482
                %v484 = vld [vmem:[%s230 + $0x17a0] sm:$0xff]
                %485 = vst [vmem:[%s231 + $0x3f0] sm:$0xff] %v484
                %v486 = vld [vmem:[%s230 + $0x17d0] sm:$0xff]
                %487 = vst [vmem:[%s231 + $0x3f8] sm:$0xff] %v486
              $region45: #{efficient_net_forward.1} parent=39 // loop_footer
                %s229 = sadd.s32 1, %s225
              $region46: #{efficient_net_forward.1} parent=39 // loop_footer_branch
                %224 = sbr.rel target = $region42
              $region47: #{efficient_net_forward.1} parent=39 // loop_exit
                _
            $region40: #{efficient_net_forward.1} parent=31 // pred_fallthru
              _
          $region32: #{efficient_net_forward.1} parent=27 // pred_fallthru
            _
          %756 = vnop
        $region28: #{efficient_net_forward.1} parent=19 // pred_fallthru
          _
        // Predicated region
        $region63: #{efficient_net_forward.1} parent=19 // pred_check
          %p757 = pneg %p98
        $region64: #{efficient_net_forward.1} parent=19 // pred_check_branch
          %759 = sbr.rel (%p757) target = $region66
        $region65: #{efficient_net_forward.1} parent=19 // pred_region
          %s760 = smul.u32 2, %s22
          %p761 = scmp.lt.s32.totalorder %s760, 11
          %s762 = scalar_select %p761, %s760, 11
          %s763 = scalar_lea.vmem %s2, %s762
          %s764 = smul.u32 2, %s22
        $region66: #{efficient_net_forward.1} parent=19 // pred_fallthru
          _
        // Predicated region
        $region67: #{efficient_net_forward.1} parent=19 // pred_check
          %p765 = pneg %p124
        $region68: #{efficient_net_forward.1} parent=19 // pred_check_branch
          %767 = sbr.rel (%p765) target = $region70
        $region69: #{efficient_net_forward.1} parent=19 // pred_region
          %s768 = smul.u32 32, %s22
          %p769 = scmp.lt.s32.totalorder %s768, 191
          %s770 = scalar_select %p769, %s768, 191
          %s771 = smul.addr %s770, 8
          %s772 = scalar_lea.vmem %s3, %s771
          %s773 = smul.u32 32, %s22
        $region70: #{efficient_net_forward.1} parent=19 // pred_fallthru
          _
      $region20: #{efficient_net_forward.1} parent=5 // pred_fallthru
        _
      %p774 = scmp.le.s32.totalorder 1, %s14
      %p775 = scmp.lt.s32.totalorder %s14, 13
      %p776 = pnand %p774, %p775
      %p777 = pneg %p776
      // Predicated region
      $region71: #{efficient_net_forward.1} parent=5 // pred_check
        _
      $region72: #{efficient_net_forward.1} parent=5 // pred_check_branch
        %779 = sbr.rel (%p776) target = $region74
      $region73: #{efficient_net_forward.1} parent=5 // pred_region
        %s780 = ssub.s32 %s14, 1
        %s781 = sand.u32 %s65, 1
        %s782 = sand.u32 %s65, 1
        %s783 = smul.addr %s782, 1024
        %s784 = scalar_lea.vmem [#allocation3], %s783
        // Predicated region
        $region75: #{efficient_net_forward.1} parent=73 // pred_check
          %p785 = pneg %p78
        $region76: #{efficient_net_forward.1} parent=73 // pred_check_branch
          %787 = sbr.rel (%p785) target = $region78
        $region77: #{efficient_net_forward.1} parent=73 // pred_region
          _
        $region78: #{efficient_net_forward.1} parent=73 // pred_fallthru
          _
        %p788 = scmp.lt.s32.totalorder %s23, 1
        %s789 = scalar_select %p788, %s23, 1
        %s790 = smul.addr %s789, 8
        %s791 = smul.addr %s790, 4
        %s792 = scalar_lea.vmem %s0, %s791
        %p793 = pneg %p52
        %p794 = pneg %p49
        %s795 = sand.u32 %s65, 1
        %s796 = sand.u32 %s65, 1
        %s797 = smul.addr %s796, 1024
        %s798 = scalar_lea.vmem [#allocation3], %s797
        %p799 = pneg %p78
        %p800 = pneg %p75
        %s801 = smul.u32 2, %s24
        %p802 = scmp.lt.s32.totalorder %s801, 11
        %s803 = scalar_select %p802, %s801, 11
        %s804 = scalar_lea.vmem %s2, %s803
        %p805 = pneg %p104
        %p806 = pneg %p101
        %s807 = smul.u32 32, %s24
        %p808 = scmp.lt.s32.totalorder %s807, 191
        %s809 = scalar_select %p808, %s807, 191
        %s810 = smul.addr %s809, 8
        %s811 = scalar_lea.vmem %s3, %s810
        %p812 = pneg %p130
        %p813 = pneg %p127
        %p814 = pneg %p151
        %p815 = pneg %p148
        %p816 = pneg %p177
        %p817 = pneg %p174
        %s818 = sand.u32 %s164, 1
        %s819 = scalar_lea.sflag [#allocation5], %s818
        %s820 = sand.u32 %s164, 1
        %s821 = scalar_lea.vmem [#allocation4], %s820
        %p822 = scmp.lt.s32.totalorder %s23, 1
        %s823 = scalar_select %p822, %s23, 1
        %s824 = smul.addr %s823, 8
        %s825 = smul.addr %s824, 4
        %s826 = scalar_lea.vmem %s0, %s825
        %s827 = smul.u32 2, %s24
        %s828 = smul.u32 2, %s24
        %p829 = scmp.lt.s32.totalorder %s828, 11
        %s830 = scalar_select %p829, %s828, 11
        %s831 = scalar_lea.vmem %s2, %s830
        %s832 = smul.u32 2, %s24
        %s833 = smul.u32 32, %s24
        %p834 = scmp.lt.s32.totalorder %s833, 191
        %s835 = scalar_select %p834, %s833, 191
        %s836 = smul.addr %s835, 8
        %s837 = scalar_lea.vmem %s3, %s836
        %s838 = smul.u32 32, %s24
        %p839 = scmp.eq.s32.totalorder %s24, 0
        // Predicated region
        $region79: #{efficient_net_forward.1} parent=73 // pred_check
          %p840 = pneg %p839
        $region80: #{efficient_net_forward.1} parent=73 // pred_check_branch
          %842 = sbr.rel (%p840) target = $region82
        $region81: #{efficient_net_forward.1} parent=73 // pred_region
          %v843 = vld [vmem:[%s4] sm:$0x1]
          %844 = vst [vmem:[#allocation2] sm:$0x1] %v843
        $region82: #{efficient_net_forward.1} parent=73 // pred_fallthru
          _
        %v845 = vld [vmem:[%s826] sm:$0xff]
        %v846 = vld [vmem:[%s826 + $0x8] sm:$0xff]
        %v847 = vld [vmem:[%s826 + $0x10] sm:$0xff]
        %v848 = vld [vmem:[%s826 + $0x18] sm:$0xff]
        %v849 = vld [vmem:[%s784] sm:$0xff]
        %v850 = vld [vmem:[%s784 + $0x8] sm:$0xff]
        %v851 = vld [vmem:[%s784 + $0x10] sm:$0xff]
        %v852 = vld [vmem:[%s784 + $0x18] sm:$0xff]
        %v853 = vld [vmem:[%s784 + $0x20] sm:$0xff]
        %v854 = vld [vmem:[%s784 + $0x28] sm:$0xff]
        %v855 = vld [vmem:[%s784 + $0x30] sm:$0xff]
        %v856 = vld [vmem:[%s784 + $0x38] sm:$0xff]
        %v857 = vld [vmem:[%s784 + $0x40] sm:$0xff]
        %v858 = vld [vmem:[%s784 + $0x48] sm:$0xff]
        %v859 = vld [vmem:[%s784 + $0x50] sm:$0xff]
        %v860 = vld [vmem:[%s784 + $0x58] sm:$0xff]
        %v861 = vld [vmem:[%s784 + $0x60] sm:$0xff]
        %v862 = vld [vmem:[%s784 + $0x68] sm:$0xff]
        %v863 = vld [vmem:[%s784 + $0x70] sm:$0xff]
        %v864 = vld [vmem:[%s784 + $0x78] sm:$0xff]
        %v865 = vld [vmem:[%s784 + $0x80] sm:$0xff]
        %v866 = vld [vmem:[%s784 + $0x88] sm:$0xff]
        %v867 = vld [vmem:[%s784 + $0x90] sm:$0xff]
        %v868 = vld [vmem:[%s784 + $0x98] sm:$0xff]
        %v869 = vld [vmem:[%s784 + $0xa0] sm:$0xff]
        %v870 = vld [vmem:[%s784 + $0xa8] sm:$0xff]
        %v871 = vld [vmem:[%s784 + $0xb0] sm:$0xff]
        %v872 = vld [vmem:[%s784 + $0xb8] sm:$0xff]
        %v873 = vld [vmem:[%s784 + $0xc0] sm:$0xff]
        %v874 = vld [vmem:[%s784 + $0xc8] sm:$0xff]
        %v875 = vld [vmem:[%s784 + $0xd0] sm:$0xff]
        %v876 = vld [vmem:[%s784 + $0xd8] sm:$0xff]
        %v877 = vld [vmem:[%s784 + $0xe0] sm:$0xff]
        %v878 = vld [vmem:[%s784 + $0xe8] sm:$0xff]
        %v879 = vld [vmem:[%s784 + $0xf0] sm:$0xff]
        %v880 = vld [vmem:[%s784 + $0xf8] sm:$0xff]
        %v881 = vld [vmem:[%s784 + $0x100] sm:$0xff]
        %v882 = vld [vmem:[%s784 + $0x108] sm:$0xff]
        %v883 = vld [vmem:[%s784 + $0x110] sm:$0xff]
        %v884 = vld [vmem:[%s784 + $0x118] sm:$0xff]
        %v885 = vld [vmem:[%s784 + $0x120] sm:$0xff]
        %v886 = vld [vmem:[%s784 + $0x128] sm:$0xff]
        %v887 = vld [vmem:[%s784 + $0x130] sm:$0xff]
        %v888 = vld [vmem:[%s784 + $0x138] sm:$0xff]
        %v889 = vld [vmem:[%s784 + $0x140] sm:$0xff]
        %v890 = vld [vmem:[%s784 + $0x148] sm:$0xff]
        %v891 = vld [vmem:[%s784 + $0x150] sm:$0xff]
        %v892 = vld [vmem:[%s784 + $0x158] sm:$0xff]
        %v893 = vld [vmem:[%s784 + $0x160] sm:$0xff]
        %v894 = vld [vmem:[%s784 + $0x168] sm:$0xff]
        %v895 = vld [vmem:[%s784 + $0x170] sm:$0xff]
        %v896 = vld [vmem:[%s784 + $0x178] sm:$0xff]
        %v897 = vld [vmem:[%s784 + $0x180] sm:$0xff]
        %v898 = vld [vmem:[%s784 + $0x188] sm:$0xff]
        %v899 = vld [vmem:[%s784 + $0x190] sm:$0xff]
        %v900 = vld [vmem:[%s784 + $0x198] sm:$0xff]
        %v901 = vld [vmem:[%s784 + $0x1a0] sm:$0xff]
        %v902 = vld [vmem:[%s784 + $0x1a8] sm:$0xff]
        %v903 = vld [vmem:[%s784 + $0x1b0] sm:$0xff]
        %v904 = vld [vmem:[%s784 + $0x1b8] sm:$0xff]
        %v905 = vld [vmem:[%s784 + $0x1c0] sm:$0xff]
        %v906 = vld [vmem:[%s784 + $0x1c8] sm:$0xff]
        %v907 = vld [vmem:[%s784 + $0x1d0] sm:$0xff]
        %v908 = vld [vmem:[%s784 + $0x1d8] sm:$0xff]
        %v909 = vld [vmem:[%s784 + $0x1e0] sm:$0xff]
        %v910 = vld [vmem:[%s784 + $0x1e8] sm:$0xff]
        %v911 = vld [vmem:[%s784 + $0x1f0] sm:$0xff]
        %v912 = vld [vmem:[%s784 + $0x1f8] sm:$0xff]
        %v913 = vld [vmem:[%s784 + $0x200] sm:$0xff]
        %v914 = vld [vmem:[%s784 + $0x208] sm:$0xff]
        %v915 = vld [vmem:[%s784 + $0x210] sm:$0xff]
        %v916 = vld [vmem:[%s784 + $0x218] sm:$0xff]
        %v917 = vld [vmem:[%s784 + $0x220] sm:$0xff]
        %v918 = vld [vmem:[%s784 + $0x228] sm:$0xff]
        %v919 = vld [vmem:[%s784 + $0x230] sm:$0xff]
        %v920 = vld [vmem:[%s784 + $0x238] sm:$0xff]
        %v921 = vld [vmem:[%s784 + $0x240] sm:$0xff]
        %v922 = vld [vmem:[%s784 + $0x248] sm:$0xff]
        %v923 = vld [vmem:[%s784 + $0x250] sm:$0xff]
        %v924 = vld [vmem:[%s784 + $0x258] sm:$0xff]
        %v925 = vld [vmem:[%s784 + $0x260] sm:$0xff]
        %v926 = vld [vmem:[%s784 + $0x268] sm:$0xff]
        %v927 = vld [vmem:[%s784 + $0x270] sm:$0xff]
        %v928 = vld [vmem:[%s784 + $0x278] sm:$0xff]
        %v929 = vld [vmem:[%s784 + $0x280] sm:$0xff]
        %v930 = vld [vmem:[%s784 + $0x288] sm:$0xff]
        %v931 = vld [vmem:[%s784 + $0x290] sm:$0xff]
        %v932 = vld [vmem:[%s784 + $0x298] sm:$0xff]
        %v933 = vld [vmem:[%s784 + $0x2a0] sm:$0xff]
        %v934 = vld [vmem:[%s784 + $0x2a8] sm:$0xff]
        %v935 = vld [vmem:[%s784 + $0x2b0] sm:$0xff]
        %v936 = vld [vmem:[%s784 + $0x2b8] sm:$0xff]
        %v937 = vld [vmem:[%s784 + $0x2c0] sm:$0xff]
        %v938 = vld [vmem:[%s784 + $0x2c8] sm:$0xff]
        %v939 = vld [vmem:[%s784 + $0x2d0] sm:$0xff]
        %v940 = vld [vmem:[%s784 + $0x2d8] sm:$0xff]
        %v941 = vld [vmem:[%s784 + $0x2e0] sm:$0xff]
        %v942 = vld [vmem:[%s784 + $0x2e8] sm:$0xff]
        %v943 = vld [vmem:[%s784 + $0x2f0] sm:$0xff]
        %v944 = vld [vmem:[%s784 + $0x2f8] sm:$0xff]
        %v945 = vld [vmem:[%s784 + $0x300] sm:$0xff]
        %v946 = vld [vmem:[%s784 + $0x308] sm:$0xff]
        %v947 = vld [vmem:[%s784 + $0x310] sm:$0xff]
        %v948 = vld [vmem:[%s784 + $0x318] sm:$0xff]
        %v949 = vld [vmem:[%s784 + $0x320] sm:$0xff]
        %v950 = vld [vmem:[%s784 + $0x328] sm:$0xff]
        %v951 = vld [vmem:[%s784 + $0x330] sm:$0xff]
        %v952 = vld [vmem:[%s784 + $0x338] sm:$0xff]
        %v953 = vld [vmem:[%s784 + $0x340] sm:$0xff]
        %v954 = vld [vmem:[%s784 + $0x348] sm:$0xff]
        %v955 = vld [vmem:[%s784 + $0x350] sm:$0xff]
        %v956 = vld [vmem:[%s784 + $0x358] sm:$0xff]
        %v957 = vld [vmem:[%s784 + $0x360] sm:$0xff]
        %v958 = vld [vmem:[%s784 + $0x368] sm:$0xff]
        %v959 = vld [vmem:[%s784 + $0x370] sm:$0xff]
        %v960 = vld [vmem:[%s784 + $0x378] sm:$0xff]
        %v961 = vld [vmem:[%s784 + $0x380] sm:$0xff]
        %v962 = vld [vmem:[%s784 + $0x388] sm:$0xff]
        %v963 = vld [vmem:[%s784 + $0x390] sm:$0xff]
        %v964 = vld [vmem:[%s784 + $0x398] sm:$0xff]
        %v965 = vld [vmem:[%s784 + $0x3a0] sm:$0xff]
        %v966 = vld [vmem:[%s784 + $0x3a8] sm:$0xff]
        %v967 = vld [vmem:[%s784 + $0x3b0] sm:$0xff]
        %v968 = vld [vmem:[%s784 + $0x3b8] sm:$0xff]
        %v969 = vld [vmem:[%s784 + $0x3c0] sm:$0xff]
        %v970 = vld [vmem:[%s784 + $0x3c8] sm:$0xff]
        %v971 = vld [vmem:[%s784 + $0x3d0] sm:$0xff]
        %v972 = vld [vmem:[%s784 + $0x3d8] sm:$0xff]
        %v973 = vld [vmem:[%s784 + $0x3e0] sm:$0xff]
        %v974 = vld [vmem:[%s784 + $0x3e8] sm:$0xff]
        %v975 = vld [vmem:[%s784 + $0x3f0] sm:$0xff]
        %v976 = vld [vmem:[%s784 + $0x3f8] sm:$0xff]
        %v977 = vld [vmem:[%s831] sm:$0x3]
        %v979 = vlaneseq
        %v980 = vshrl.u32 %v979, 7
        %v981 = vsub.s32 0, %v980
        %v982 = vrot.slane %v977, %v981
        %v983 = vlaneseq
        %v984 = vshrl.u32 %v983, 7
        %v985 = vsub.s32 1, %v984
        %v986 = vrot.slane %v977, %v985
        %v993 = vunpack.c.l.b16 %v845
        %v994 = vunpack.c.h.b16 %v845
        %v995 = vunpack.c.l.b16 %v846
        %v996 = vunpack.c.h.b16 %v846
        %v997 = vunpack.c.l.b16 %v847
        %v998 = vunpack.c.h.b16 %v847
        %v999 = vunpack.c.l.b16 %v848
        %v1000 = vunpack.c.h.b16 %v848
        %v1001 = vpack.c.b16 %v993, %v993
        %v1002 = vpack.c.b16 %v994, %v994
        %v1003 = vpack.c.b16 %v995, %v995
        %v1004 = vpack.c.b16 %v996, %v996
        %v1005 = vpack.c.b16 %v997, %v997
        %v1006 = vpack.c.b16 %v998, %v998
        %v1007 = vpack.c.b16 %v999, %v999
        %v1008 = vpack.c.b16 %v1000, %v1000
        %v1145 = vunpack.c.l.b16 %v849
        %v1146 = vunpack.c.h.b16 %v849
        %v1147 = vunpack.c.l.b16 %v850
        %v1148 = vunpack.c.h.b16 %v850
        %v1149 = vunpack.c.l.b16 %v851
        %v1150 = vunpack.c.h.b16 %v851
        %v1151 = vunpack.c.l.b16 %v852
        %v1152 = vunpack.c.h.b16 %v852
        %v1153 = vunpack.c.l.b16 %v853
        %v1154 = vunpack.c.h.b16 %v853
        %v1155 = vunpack.c.l.b16 %v854
        %v1156 = vunpack.c.h.b16 %v854
        %v1157 = vunpack.c.l.b16 %v855
        %v1158 = vunpack.c.h.b16 %v855
        %v1159 = vunpack.c.l.b16 %v856
        %v1160 = vunpack.c.h.b16 %v856
        %v1161 = vunpack.c.l.b16 %v857
        %v1162 = vunpack.c.h.b16 %v857
        %v1163 = vunpack.c.l.b16 %v858
        %v1164 = vunpack.c.h.b16 %v858
        %v1165 = vunpack.c.l.b16 %v859
        %v1166 = vunpack.c.h.b16 %v859
        %v1167 = vunpack.c.l.b16 %v860
        %v1168 = vunpack.c.h.b16 %v860
        %v1169 = vunpack.c.l.b16 %v861
        %v1170 = vunpack.c.h.b16 %v861
        %v1171 = vunpack.c.l.b16 %v862
        %v1172 = vunpack.c.h.b16 %v862
        %v1173 = vunpack.c.l.b16 %v863
        %v1174 = vunpack.c.h.b16 %v863
        %v1175 = vunpack.c.l.b16 %v864
        %v1176 = vunpack.c.h.b16 %v864
        %v1177 = vunpack.c.l.b16 %v865
        %v1178 = vunpack.c.h.b16 %v865
        %v1179 = vunpack.c.l.b16 %v866
        %v1180 = vunpack.c.h.b16 %v866
        %v1181 = vunpack.c.l.b16 %v867
        %v1182 = vunpack.c.h.b16 %v867
        %v1183 = vunpack.c.l.b16 %v868
        %v1184 = vunpack.c.h.b16 %v868
        %v1185 = vunpack.c.l.b16 %v869
        %v1186 = vunpack.c.h.b16 %v869
        %v1187 = vunpack.c.l.b16 %v870
        %v1188 = vunpack.c.h.b16 %v870
        %v1189 = vunpack.c.l.b16 %v871
        %v1190 = vunpack.c.h.b16 %v871
        %v1191 = vunpack.c.l.b16 %v872
        %v1192 = vunpack.c.h.b16 %v872
        %v1193 = vunpack.c.l.b16 %v873
        %v1194 = vunpack.c.h.b16 %v873
        %v1195 = vunpack.c.l.b16 %v874
        %v1196 = vunpack.c.h.b16 %v874
        %v1197 = vunpack.c.l.b16 %v875
        %v1198 = vunpack.c.h.b16 %v875
        %v1199 = vunpack.c.l.b16 %v876
        %v1200 = vunpack.c.h.b16 %v876
        %v1201 = vunpack.c.l.b16 %v877
        %v1202 = vunpack.c.h.b16 %v877
        %v1203 = vunpack.c.l.b16 %v878
        %v1204 = vunpack.c.h.b16 %v878
        %v1205 = vunpack.c.l.b16 %v879
        %v1206 = vunpack.c.h.b16 %v879
        %v1207 = vunpack.c.l.b16 %v880
        %v1208 = vunpack.c.h.b16 %v880
        %v1209 = vunpack.c.l.b16 %v881
        %v1210 = vunpack.c.h.b16 %v881
        %v1211 = vunpack.c.l.b16 %v882
        %v1212 = vunpack.c.h.b16 %v882
        %v1213 = vunpack.c.l.b16 %v883
        %v1214 = vunpack.c.h.b16 %v883
        %v1215 = vunpack.c.l.b16 %v884
        %v1216 = vunpack.c.h.b16 %v884
        %v1217 = vunpack.c.l.b16 %v885
        %v1218 = vunpack.c.h.b16 %v885
        %v1219 = vunpack.c.l.b16 %v886
        %v1220 = vunpack.c.h.b16 %v886
        %v1221 = vunpack.c.l.b16 %v887
        %v1222 = vunpack.c.h.b16 %v887
        %v1223 = vunpack.c.l.b16 %v888
        %v1224 = vunpack.c.h.b16 %v888
        %v1225 = vunpack.c.l.b16 %v889
        %v1226 = vunpack.c.h.b16 %v889
        %v1227 = vunpack.c.l.b16 %v890
        %v1228 = vunpack.c.h.b16 %v890
        %v1229 = vunpack.c.l.b16 %v891
        %v1230 = vunpack.c.h.b16 %v891
        %v1231 = vunpack.c.l.b16 %v892
        %v1232 = vunpack.c.h.b16 %v892
        %v1233 = vunpack.c.l.b16 %v893
        %v1234 = vunpack.c.h.b16 %v893
        %v1235 = vunpack.c.l.b16 %v894
        %v1236 = vunpack.c.h.b16 %v894
        %v1237 = vunpack.c.l.b16 %v895
        %v1238 = vunpack.c.h.b16 %v895
        %v1239 = vunpack.c.l.b16 %v896
        %v1240 = vunpack.c.h.b16 %v896
        %v1241 = vunpack.c.l.b16 %v897
        %v1242 = vunpack.c.h.b16 %v897
        %v1243 = vunpack.c.l.b16 %v898
        %v1244 = vunpack.c.h.b16 %v898
        %v1245 = vunpack.c.l.b16 %v899
        %v1246 = vunpack.c.h.b16 %v899
        %v1247 = vunpack.c.l.b16 %v900
        %v1248 = vunpack.c.h.b16 %v900
        %v1249 = vunpack.c.l.b16 %v901
        %v1250 = vunpack.c.h.b16 %v901
        %v1251 = vunpack.c.l.b16 %v902
        %v1252 = vunpack.c.h.b16 %v902
        %v1253 = vunpack.c.l.b16 %v903
        %v1254 = vunpack.c.h.b16 %v903
        %v1255 = vunpack.c.l.b16 %v904
        %v1256 = vunpack.c.h.b16 %v904
        %v1257 = vunpack.c.l.b16 %v905
        %v1258 = vunpack.c.h.b16 %v905
        %v1259 = vunpack.c.l.b16 %v906
        %v1260 = vunpack.c.h.b16 %v906
        %v1261 = vunpack.c.l.b16 %v907
        %v1262 = vunpack.c.h.b16 %v907
        %v1263 = vunpack.c.l.b16 %v908
        %v1264 = vunpack.c.h.b16 %v908
        %v1265 = vunpack.c.l.b16 %v909
        %v1266 = vunpack.c.h.b16 %v909
        %v1267 = vunpack.c.l.b16 %v910
        %v1268 = vunpack.c.h.b16 %v910
        %v1269 = vunpack.c.l.b16 %v911
        %v1270 = vunpack.c.h.b16 %v911
        %v1271 = vunpack.c.l.b16 %v912
        %v1272 = vunpack.c.h.b16 %v912
        %v1273 = vunpack.c.l.b16 %v913
        %v1274 = vunpack.c.h.b16 %v913
        %v1275 = vunpack.c.l.b16 %v914
        %v1276 = vunpack.c.h.b16 %v914
        %v1277 = vunpack.c.l.b16 %v915
        %v1278 = vunpack.c.h.b16 %v915
        %v1279 = vunpack.c.l.b16 %v916
        %v1280 = vunpack.c.h.b16 %v916
        %v1281 = vunpack.c.l.b16 %v917
        %v1282 = vunpack.c.h.b16 %v917
        %v1283 = vunpack.c.l.b16 %v918
        %v1284 = vunpack.c.h.b16 %v918
        %v1285 = vunpack.c.l.b16 %v919
        %v1286 = vunpack.c.h.b16 %v919
        %v1287 = vunpack.c.l.b16 %v920
        %v1288 = vunpack.c.h.b16 %v920
        %v1289 = vunpack.c.l.b16 %v921
        %v1290 = vunpack.c.h.b16 %v921
        %v1291 = vunpack.c.l.b16 %v922
        %v1292 = vunpack.c.h.b16 %v922
        %v1293 = vunpack.c.l.b16 %v923
        %v1294 = vunpack.c.h.b16 %v923
        %v1295 = vunpack.c.l.b16 %v924
        %v1296 = vunpack.c.h.b16 %v924
        %v1297 = vunpack.c.l.b16 %v925
        %v1298 = vunpack.c.h.b16 %v925
        %v1299 = vunpack.c.l.b16 %v926
        %v1300 = vunpack.c.h.b16 %v926
        %v1301 = vunpack.c.l.b16 %v927
        %v1302 = vunpack.c.h.b16 %v927
        %v1303 = vunpack.c.l.b16 %v928
        %v1304 = vunpack.c.h.b16 %v928
        %v1305 = vunpack.c.l.b16 %v929
        %v1306 = vunpack.c.h.b16 %v929
        %v1307 = vunpack.c.l.b16 %v930
        %v1308 = vunpack.c.h.b16 %v930
        %v1309 = vunpack.c.l.b16 %v931
        %v1310 = vunpack.c.h.b16 %v931
        %v1311 = vunpack.c.l.b16 %v932
        %v1312 = vunpack.c.h.b16 %v932
        %v1313 = vunpack.c.l.b16 %v933
        %v1314 = vunpack.c.h.b16 %v933
        %v1315 = vunpack.c.l.b16 %v934
        %v1316 = vunpack.c.h.b16 %v934
        %v1317 = vunpack.c.l.b16 %v935
        %v1318 = vunpack.c.h.b16 %v935
        %v1319 = vunpack.c.l.b16 %v936
        %v1320 = vunpack.c.h.b16 %v936
        %v1321 = vunpack.c.l.b16 %v937
        %v1322 = vunpack.c.h.b16 %v937
        %v1323 = vunpack.c.l.b16 %v938
        %v1324 = vunpack.c.h.b16 %v938
        %v1325 = vunpack.c.l.b16 %v939
        %v1326 = vunpack.c.h.b16 %v939
        %v1327 = vunpack.c.l.b16 %v940
        %v1328 = vunpack.c.h.b16 %v940
        %v1329 = vunpack.c.l.b16 %v941
        %v1330 = vunpack.c.h.b16 %v941
        %v1331 = vunpack.c.l.b16 %v942
        %v1332 = vunpack.c.h.b16 %v942
        %v1333 = vunpack.c.l.b16 %v943
        %v1334 = vunpack.c.h.b16 %v943
        %v1335 = vunpack.c.l.b16 %v944
        %v1336 = vunpack.c.h.b16 %v944
        %v1337 = vunpack.c.l.b16 %v945
        %v1338 = vunpack.c.h.b16 %v945
        %v1339 = vunpack.c.l.b16 %v946
        %v1340 = vunpack.c.h.b16 %v946
        %v1341 = vunpack.c.l.b16 %v947
        %v1342 = vunpack.c.h.b16 %v947
        %v1343 = vunpack.c.l.b16 %v948
        %v1344 = vunpack.c.h.b16 %v948
        %v1345 = vunpack.c.l.b16 %v949
        %v1346 = vunpack.c.h.b16 %v949
        %v1347 = vunpack.c.l.b16 %v950
        %v1348 = vunpack.c.h.b16 %v950
        %v1349 = vunpack.c.l.b16 %v951
        %v1350 = vunpack.c.h.b16 %v951
        %v1351 = vunpack.c.l.b16 %v952
        %v1352 = vunpack.c.h.b16 %v952
        %v1353 = vunpack.c.l.b16 %v953
        %v1354 = vunpack.c.h.b16 %v953
        %v1355 = vunpack.c.l.b16 %v954
        %v1356 = vunpack.c.h.b16 %v954
        %v1357 = vunpack.c.l.b16 %v955
        %v1358 = vunpack.c.h.b16 %v955
        %v1359 = vunpack.c.l.b16 %v956
        %v1360 = vunpack.c.h.b16 %v956
        %v1361 = vunpack.c.l.b16 %v957
        %v1362 = vunpack.c.h.b16 %v957
        %v1363 = vunpack.c.l.b16 %v958
        %v1364 = vunpack.c.h.b16 %v958
        %v1365 = vunpack.c.l.b16 %v959
        %v1366 = vunpack.c.h.b16 %v959
        %v1367 = vunpack.c.l.b16 %v960
        %v1368 = vunpack.c.h.b16 %v960
        %v1369 = vunpack.c.l.b16 %v961
        %v1370 = vunpack.c.h.b16 %v961
        %v1371 = vunpack.c.l.b16 %v962
        %v1372 = vunpack.c.h.b16 %v962
        %v1373 = vunpack.c.l.b16 %v963
        %v1374 = vunpack.c.h.b16 %v963
        %v1375 = vunpack.c.l.b16 %v964
        %v1376 = vunpack.c.h.b16 %v964
        %v1377 = vunpack.c.l.b16 %v965
        %v1378 = vunpack.c.h.b16 %v965
        %v1379 = vunpack.c.l.b16 %v966
        %v1380 = vunpack.c.h.b16 %v966
        %v1381 = vunpack.c.l.b16 %v967
        %v1382 = vunpack.c.h.b16 %v967
        %v1383 = vunpack.c.l.b16 %v968
        %v1384 = vunpack.c.h.b16 %v968
        %v1385 = vunpack.c.l.b16 %v969
        %v1386 = vunpack.c.h.b16 %v969
        %v1387 = vunpack.c.l.b16 %v970
        %v1388 = vunpack.c.h.b16 %v970
        %v1389 = vunpack.c.l.b16 %v971
        %v1390 = vunpack.c.h.b16 %v971
        %v1391 = vunpack.c.l.b16 %v972
        %v1392 = vunpack.c.h.b16 %v972
        %v1393 = vunpack.c.l.b16 %v973
        %v1394 = vunpack.c.h.b16 %v973
        %v1395 = vunpack.c.l.b16 %v974
        %v1396 = vunpack.c.h.b16 %v974
        %v1397 = vunpack.c.l.b16 %v975
        %v1398 = vunpack.c.h.b16 %v975
        %v1399 = vunpack.c.l.b16 %v976
        %v1400 = vunpack.c.h.b16 %v976
        %v1401 = vpack.c.b16 %v1147, %v1145
        %v1402 = vpack.c.b16 %v1148, %v1146
        %v1403 = vpack.c.b16 %v1151, %v1149
        %v1404 = vpack.c.b16 %v1152, %v1150
        %v1405 = vpack.c.b16 %v1155, %v1153
        %v1406 = vpack.c.b16 %v1156, %v1154
        %v1407 = vpack.c.b16 %v1159, %v1157
        %v1408 = vpack.c.b16 %v1160, %v1158
        %v1409 = vpack.c.b16 %v1163, %v1161
        %v1410 = vpack.c.b16 %v1164, %v1162
        %v1411 = vpack.c.b16 %v1167, %v1165
        %v1412 = vpack.c.b16 %v1168, %v1166
        %v1413 = vpack.c.b16 %v1171, %v1169
        %v1414 = vpack.c.b16 %v1172, %v1170
        %v1415 = vpack.c.b16 %v1175, %v1173
        %v1416 = vpack.c.b16 %v1176, %v1174
        %v1417 = vpack.c.b16 %v1179, %v1177
        %v1418 = vpack.c.b16 %v1180, %v1178
        %v1419 = vpack.c.b16 %v1183, %v1181
        %v1420 = vpack.c.b16 %v1184, %v1182
        %v1421 = vpack.c.b16 %v1187, %v1185
        %v1422 = vpack.c.b16 %v1188, %v1186
        %v1423 = vpack.c.b16 %v1191, %v1189
        %v1424 = vpack.c.b16 %v1192, %v1190
        %v1425 = vpack.c.b16 %v1195, %v1193
        %v1426 = vpack.c.b16 %v1196, %v1194
        %v1427 = vpack.c.b16 %v1199, %v1197
        %v1428 = vpack.c.b16 %v1200, %v1198
        %v1429 = vpack.c.b16 %v1203, %v1201
        %v1430 = vpack.c.b16 %v1204, %v1202
        %v1431 = vpack.c.b16 %v1207, %v1205
        %v1432 = vpack.c.b16 %v1208, %v1206
        %v1433 = vpack.c.b16 %v1211, %v1209
        %v1434 = vpack.c.b16 %v1212, %v1210
        %v1435 = vpack.c.b16 %v1215, %v1213
        %v1436 = vpack.c.b16 %v1216, %v1214
        %v1437 = vpack.c.b16 %v1219, %v1217
        %v1438 = vpack.c.b16 %v1220, %v1218
        %v1439 = vpack.c.b16 %v1223, %v1221
        %v1440 = vpack.c.b16 %v1224, %v1222
        %v1441 = vpack.c.b16 %v1227, %v1225
        %v1442 = vpack.c.b16 %v1228, %v1226
        %v1443 = vpack.c.b16 %v1231, %v1229
        %v1444 = vpack.c.b16 %v1232, %v1230
        %v1445 = vpack.c.b16 %v1235, %v1233
        %v1446 = vpack.c.b16 %v1236, %v1234
        %v1447 = vpack.c.b16 %v1239, %v1237
        %v1448 = vpack.c.b16 %v1240, %v1238
        %v1449 = vpack.c.b16 %v1243, %v1241
        %v1450 = vpack.c.b16 %v1244, %v1242
        %v1451 = vpack.c.b16 %v1247, %v1245
        %v1452 = vpack.c.b16 %v1248, %v1246
        %v1453 = vpack.c.b16 %v1251, %v1249
        %v1454 = vpack.c.b16 %v1252, %v1250
        %v1455 = vpack.c.b16 %v1255, %v1253
        %v1456 = vpack.c.b16 %v1256, %v1254
        %v1457 = vpack.c.b16 %v1259, %v1257
        %v1458 = vpack.c.b16 %v1260, %v1258
        %v1459 = vpack.c.b16 %v1263, %v1261
        %v1460 = vpack.c.b16 %v1264, %v1262
        %v1461 = vpack.c.b16 %v1267, %v1265
        %v1462 = vpack.c.b16 %v1268, %v1266
        %v1463 = vpack.c.b16 %v1271, %v1269
        %v1464 = vpack.c.b16 %v1272, %v1270
        %v1465 = vpack.c.b16 %v1275, %v1273
        %v1466 = vpack.c.b16 %v1276, %v1274
        %v1467 = vpack.c.b16 %v1279, %v1277
        %v1468 = vpack.c.b16 %v1280, %v1278
        %v1469 = vpack.c.b16 %v1283, %v1281
        %v1470 = vpack.c.b16 %v1284, %v1282
        %v1471 = vpack.c.b16 %v1287, %v1285
        %v1472 = vpack.c.b16 %v1288, %v1286
        %v1473 = vpack.c.b16 %v1291, %v1289
        %v1474 = vpack.c.b16 %v1292, %v1290
        %v1475 = vpack.c.b16 %v1295, %v1293
        %v1476 = vpack.c.b16 %v1296, %v1294
        %v1477 = vpack.c.b16 %v1299, %v1297
        %v1478 = vpack.c.b16 %v1300, %v1298
        %v1479 = vpack.c.b16 %v1303, %v1301
        %v1480 = vpack.c.b16 %v1304, %v1302
        %v1481 = vpack.c.b16 %v1307, %v1305
        %v1482 = vpack.c.b16 %v1308, %v1306
        %v1483 = vpack.c.b16 %v1311, %v1309
        %v1484 = vpack.c.b16 %v1312, %v1310
        %v1485 = vpack.c.b16 %v1315, %v1313
        %v1486 = vpack.c.b16 %v1316, %v1314
        %v1487 = vpack.c.b16 %v1319, %v1317
        %v1488 = vpack.c.b16 %v1320, %v1318
        %v1489 = vpack.c.b16 %v1323, %v1321
        %v1490 = vpack.c.b16 %v1324, %v1322
        %v1491 = vpack.c.b16 %v1327, %v1325
        %v1492 = vpack.c.b16 %v1328, %v1326
        %v1493 = vpack.c.b16 %v1331, %v1329
        %v1494 = vpack.c.b16 %v1332, %v1330
        %v1495 = vpack.c.b16 %v1335, %v1333
        %v1496 = vpack.c.b16 %v1336, %v1334
        %v1497 = vpack.c.b16 %v1339, %v1337
        %v1498 = vpack.c.b16 %v1340, %v1338
        %v1499 = vpack.c.b16 %v1343, %v1341
        %v1500 = vpack.c.b16 %v1344, %v1342
        %v1501 = vpack.c.b16 %v1347, %v1345
        %v1502 = vpack.c.b16 %v1348, %v1346
        %v1503 = vpack.c.b16 %v1351, %v1349
        %v1504 = vpack.c.b16 %v1352, %v1350
        %v1505 = vpack.c.b16 %v1355, %v1353
        %v1506 = vpack.c.b16 %v1356, %v1354
        %v1507 = vpack.c.b16 %v1359, %v1357
        %v1508 = vpack.c.b16 %v1360, %v1358
        %v1509 = vpack.c.b16 %v1363, %v1361
        %v1510 = vpack.c.b16 %v1364, %v1362
        %v1511 = vpack.c.b16 %v1367, %v1365
        %v1512 = vpack.c.b16 %v1368, %v1366
        %v1513 = vpack.c.b16 %v1371, %v1369
        %v1514 = vpack.c.b16 %v1372, %v1370
        %v1515 = vpack.c.b16 %v1375, %v1373
        %v1516 = vpack.c.b16 %v1376, %v1374
        %v1517 = vpack.c.b16 %v1379, %v1377
        %v1518 = vpack.c.b16 %v1380, %v1378
        %v1519 = vpack.c.b16 %v1383, %v1381
        %v1520 = vpack.c.b16 %v1384, %v1382
        %v1521 = vpack.c.b16 %v1387, %v1385
        %v1522 = vpack.c.b16 %v1388, %v1386
        %v1523 = vpack.c.b16 %v1391, %v1389
        %v1524 = vpack.c.b16 %v1392, %v1390
        %v1525 = vpack.c.b16 %v1395, %v1393
        %v1526 = vpack.c.b16 %v1396, %v1394
        %v1527 = vpack.c.b16 %v1399, %v1397
        %v1528 = vpack.c.b16 %v1400, %v1398
        %1657 = vmatprep.subr.bf16.mxu0 %v1402
        %1658 = vmatpush1.bf16.msra.mxu0 %v1401
        %1659 = vmatprep.subr.bf16.mxu0 %v1404
        %1660 = vmatpush1.bf16.msra.mxu0 %v1403
        %1661 = vmatprep.subr.bf16.mxu0 %v1406
        %1662 = vmatpush1.bf16.msra.mxu0 %v1405
        %1663 = vmatprep.subr.bf16.mxu0 %v1408
        %1664 = vmatpush1.bf16.msra.mxu0 %v1407
        %1665 = vmatprep.subr.bf16.mxu0 %v1410
        %1666 = vmatpush1.bf16.msra.mxu0 %v1409
        %1667 = vmatprep.subr.bf16.mxu0 %v1412
        %1668 = vmatpush1.bf16.msra.mxu0 %v1411
        %1669 = vmatprep.subr.bf16.mxu0 %v1414
        %1670 = vmatpush1.bf16.msra.mxu0 %v1413
        %1671 = vmatprep.subr.bf16.mxu0 %v1416
        %1672 = vmatpush1.bf16.msra.mxu0 %v1415
        %1673 = vmatprep.subr.bf16.mxu0 %v1418
        %1674 = vmatpush1.bf16.msra.mxu0 %v1417
        %1675 = vmatprep.subr.bf16.mxu0 %v1420
        %1676 = vmatpush1.bf16.msra.mxu0 %v1419
        %1677 = vmatprep.subr.bf16.mxu0 %v1422
        %1678 = vmatpush1.bf16.msra.mxu0 %v1421
        %1679 = vmatprep.subr.bf16.mxu0 %v1424
        %1680 = vmatpush1.bf16.msra.mxu0 %v1423
        %1681 = vmatprep.subr.bf16.mxu0 %v1426
        %1682 = vmatpush1.bf16.msra.mxu0 %v1425
        %1683 = vmatprep.subr.bf16.mxu0 %v1428
        %1684 = vmatpush1.bf16.msra.mxu0 %v1427
        %1685 = vmatprep.subr.bf16.mxu0 %v1430
        %1686 = vmatpush1.bf16.msra.mxu0 %v1429
        %1687 = vmatprep.subr.bf16.mxu0 %v1432
        %1688 = vmatpush1.bf16.msra.mxu0 %v1431
        %1689 = vmatprep.mubr.bf16.mxu0 %v1002
        %1690 = vmatmul.mubr.bf16.gmra.mrb[0].mxu0 %v1001
        %v1691 = vpop.f32.mrb[0].mxu0
        %v1692 = vadd.f32 %v982, %v1691
        %v1693 = vpop.f32.mrb[0].mxu0
        %v1694 = vadd.f32 %v986, %v1693
        %v1695 = vpop.f32.mrb[0].mxu0
        %v1696 = vpop.f32.mrb[0].mxu0
        %1697 = vdwg.mxu0
        %1698 = vmatprep.subr.bf16.mxu0 %v1434
        %1699 = vmatpush1.bf16.msra.mxu0 %v1433
        %1700 = vmatprep.subr.bf16.mxu0 %v1436
        %1701 = vmatpush1.bf16.msra.mxu0 %v1435
        %1702 = vmatprep.subr.bf16.mxu0 %v1438
        %1703 = vmatpush1.bf16.msra.mxu0 %v1437
        %1704 = vmatprep.subr.bf16.mxu0 %v1440
        %1705 = vmatpush1.bf16.msra.mxu0 %v1439
        %1706 = vmatprep.subr.bf16.mxu0 %v1442
        %1707 = vmatpush1.bf16.msra.mxu0 %v1441
        %1708 = vmatprep.subr.bf16.mxu0 %v1444
        %1709 = vmatpush1.bf16.msra.mxu0 %v1443
        %1710 = vmatprep.subr.bf16.mxu0 %v1446
        %1711 = vmatpush1.bf16.msra.mxu0 %v1445
        %1712 = vmatprep.subr.bf16.mxu0 %v1448
        %1713 = vmatpush1.bf16.msra.mxu0 %v1447
        %1714 = vmatprep.subr.bf16.mxu0 %v1450
        %1715 = vmatpush1.bf16.msra.mxu0 %v1449
        %1716 = vmatprep.subr.bf16.mxu0 %v1452
        %1717 = vmatpush1.bf16.msra.mxu0 %v1451
        %1718 = vmatprep.subr.bf16.mxu0 %v1454
        %1719 = vmatpush1.bf16.msra.mxu0 %v1453
        %1720 = vmatprep.subr.bf16.mxu0 %v1456
        %1721 = vmatpush1.bf16.msra.mxu0 %v1455
        %1722 = vmatprep.subr.bf16.mxu0 %v1458
        %1723 = vmatpush1.bf16.msra.mxu0 %v1457
        %1724 = vmatprep.subr.bf16.mxu0 %v1460
        %1725 = vmatpush1.bf16.msra.mxu0 %v1459
        %1726 = vmatprep.subr.bf16.mxu0 %v1462
        %1727 = vmatpush1.bf16.msra.mxu0 %v1461
        %1728 = vmatprep.subr.bf16.mxu0 %v1464
        %1729 = vmatpush1.bf16.msra.mxu0 %v1463
        %1730 = vmatprep.mubr.bf16.mxu0 %v1004
        %1731 = vmatmul.mubr.bf16.gmra.mrb[0].mxu0 %v1003
        %v1732 = vpop.f32.mrb[0].mxu0
        %v1733 = vadd.f32 %v1692, %v1732
        %v1734 = vpop.f32.mrb[0].mxu0
        %v1735 = vadd.f32 %v1694, %v1734
        %v1736 = vpop.f32.mrb[0].mxu0
        %v1737 = vpop.f32.mrb[0].mxu0
        %1738 = vdwg.mxu0
        %1739 = vmatprep.subr.bf16.mxu0 %v1466
        %1740 = vmatpush1.bf16.msra.mxu0 %v1465
        %1741 = vmatprep.subr.bf16.mxu0 %v1468
        %1742 = vmatpush1.bf16.msra.mxu0 %v1467
        %1743 = vmatprep.subr.bf16.mxu0 %v1470
        %1744 = vmatpush1.bf16.msra.mxu0 %v1469
        %1745 = vmatprep.subr.bf16.mxu0 %v1472
        %1746 = vmatpush1.bf16.msra.mxu0 %v1471
        %1747 = vmatprep.subr.bf16.mxu0 %v1474
        %1748 = vmatpush1.bf16.msra.mxu0 %v1473
        %1749 = vmatprep.subr.bf16.mxu0 %v1476
        %1750 = vmatpush1.bf16.msra.mxu0 %v1475
        %1751 = vmatprep.subr.bf16.mxu0 %v1478
        %1752 = vmatpush1.bf16.msra.mxu0 %v1477
        %1753 = vmatprep.subr.bf16.mxu0 %v1480
        %1754 = vmatpush1.bf16.msra.mxu0 %v1479
        %1755 = vmatprep.subr.bf16.mxu0 %v1482
        %1756 = vmatpush1.bf16.msra.mxu0 %v1481
        %1757 = vmatprep.subr.bf16.mxu0 %v1484
        %1758 = vmatpush1.bf16.msra.mxu0 %v1483
        %1759 = vmatprep.subr.bf16.mxu0 %v1486
        %1760 = vmatpush1.bf16.msra.mxu0 %v1485
        %1761 = vmatprep.subr.bf16.mxu0 %v1488
        %1762 = vmatpush1.bf16.msra.mxu0 %v1487
        %1763 = vmatprep.subr.bf16.mxu0 %v1490
        %1764 = vmatpush1.bf16.msra.mxu0 %v1489
        %1765 = vmatprep.subr.bf16.mxu0 %v1492
        %1766 = vmatpush1.bf16.msra.mxu0 %v1491
        %1767 = vmatprep.subr.bf16.mxu0 %v1494
        %1768 = vmatpush1.bf16.msra.mxu0 %v1493
        %1769 = vmatprep.subr.bf16.mxu0 %v1496
        %1770 = vmatpush1.bf16.msra.mxu0 %v1495
        %1771 = vmatprep.mubr.bf16.mxu0 %v1006
        %1772 = vmatmul.mubr.bf16.gmra.mrb[0].mxu0 %v1005
        %v1773 = vpop.f32.mrb[0].mxu0
        %v1774 = vadd.f32 %v1733, %v1773
        %v1775 = vpop.f32.mrb[0].mxu0
        %v1776 = vadd.f32 %v1735, %v1775
        %v1777 = vpop.f32.mrb[0].mxu0
        %v1778 = vpop.f32.mrb[0].mxu0
        %1779 = vdwg.mxu0
        %1780 = vmatprep.subr.bf16.mxu0 %v1498
        %1781 = vmatpush1.bf16.msra.mxu0 %v1497
        %1782 = vmatprep.subr.bf16.mxu0 %v1500
        %1783 = vmatpush1.bf16.msra.mxu0 %v1499
        %1784 = vmatprep.subr.bf16.mxu0 %v1502
        %1785 = vmatpush1.bf16.msra.mxu0 %v1501
        %1786 = vmatprep.subr.bf16.mxu0 %v1504
        %1787 = vmatpush1.bf16.msra.mxu0 %v1503
        %1788 = vmatprep.subr.bf16.mxu0 %v1506
        %1789 = vmatpush1.bf16.msra.mxu0 %v1505
        %1790 = vmatprep.subr.bf16.mxu0 %v1508
        %1791 = vmatpush1.bf16.msra.mxu0 %v1507
        %1792 = vmatprep.subr.bf16.mxu0 %v1510
        %1793 = vmatpush1.bf16.msra.mxu0 %v1509
        %1794 = vmatprep.subr.bf16.mxu0 %v1512
        %1795 = vmatpush1.bf16.msra.mxu0 %v1511
        %1796 = vmatprep.subr.bf16.mxu0 %v1514
        %1797 = vmatpush1.bf16.msra.mxu0 %v1513
        %1798 = vmatprep.subr.bf16.mxu0 %v1516
        %1799 = vmatpush1.bf16.msra.mxu0 %v1515
        %1800 = vmatprep.subr.bf16.mxu0 %v1518
        %1801 = vmatpush1.bf16.msra.mxu0 %v1517
        %1802 = vmatprep.subr.bf16.mxu0 %v1520
        %1803 = vmatpush1.bf16.msra.mxu0 %v1519
        %1804 = vmatprep.subr.bf16.mxu0 %v1522
        %1805 = vmatpush1.bf16.msra.mxu0 %v1521
        %1806 = vmatprep.subr.bf16.mxu0 %v1524
        %1807 = vmatpush1.bf16.msra.mxu0 %v1523
        %1808 = vmatprep.subr.bf16.mxu0 %v1526
        %1809 = vmatpush1.bf16.msra.mxu0 %v1525
        %1810 = vmatprep.subr.bf16.mxu0 %v1528
        %1811 = vmatpush1.bf16.msra.mxu0 %v1527
        %1812 = vmatprep.mubr.bf16.mxu0 %v1008
        %1813 = vmatmul.mubr.bf16.gmra.mrb[0].mxu0 %v1007
        %v1814 = vpop.f32.mrb[0].mxu0
        %v1815 = vadd.f32 %v1774, %v1814
        %v1816 = vpop.f32.mrb[0].mxu0
        %v1817 = vadd.f32 %v1776, %v1816
        %v1818 = vpop.f32.mrb[0].mxu0
        %v1819 = vpop.f32.mrb[0].mxu0
        %1820 = vdwg.mxu0
        %v1821 = vrot.slane %v1815, 4
        %v1822 = vadd.f32 %v1815, %v1821
        %v1823 = vrot.slane %v1822, 2
        %v1824 = vadd.f32 %v1822, %v1823
        %v1825 = vrot.slane %v1824, 1
        %v1826 = vadd.f32 %v1824, %v1825
        %v1827 = vrot.slane %v1817, 4
        %v1828 = vadd.f32 %v1817, %v1827
        %v1829 = vrot.slane %v1828, 2
        %v1830 = vadd.f32 %v1828, %v1829
        %v1831 = vrot.slane %v1830, 1
        %v1832 = vadd.f32 %v1830, %v1831
        %v1833 = vrcp.pop 8.0
        %v1834 = vmul.f32 %v1826, %v1833
        %v1835 = vmul.f32 %v1832, %v1833
        %v1836 = vld [vmem:[#allocation2] sm:$0x1]
        %v1837 = vld [vmem:[%s837] sm:$0xff]
        %v1838 = vld [vmem:[%s837 + $0x8] sm:$0xff]
        %v1839 = vld [vmem:[%s837 + $0x10] sm:$0xff]
        %v1840 = vld [vmem:[%s837 + $0x18] sm:$0xff]
        %v1841 = vld [vmem:[%s837 + $0x20] sm:$0xff]
        %v1842 = vld [vmem:[%s837 + $0x28] sm:$0xff]
        %v1843 = vld [vmem:[%s837 + $0x30] sm:$0xff]
        %v1844 = vld [vmem:[%s837 + $0x38] sm:$0xff]
        %v1845 = vld [vmem:[%s837 + $0x40] sm:$0xff]
        %v1846 = vld [vmem:[%s837 + $0x48] sm:$0xff]
        %v1847 = vld [vmem:[%s837 + $0x50] sm:$0xff]
        %v1848 = vld [vmem:[%s837 + $0x58] sm:$0xff]
        %v1849 = vld [vmem:[%s837 + $0x60] sm:$0xff]
        %v1850 = vld [vmem:[%s837 + $0x68] sm:$0xff]
        %v1851 = vld [vmem:[%s837 + $0x70] sm:$0xff]
        %v1852 = vld [vmem:[%s837 + $0x78] sm:$0xff]
        %v1853 = vld [vmem:[%s837 + $0x80] sm:$0xff]
        %v1854 = vld [vmem:[%s837 + $0x88] sm:$0xff]
        %v1855 = vld [vmem:[%s837 + $0x90] sm:$0xff]
        %v1856 = vld [vmem:[%s837 + $0x98] sm:$0xff]
        %v1857 = vld [vmem:[%s837 + $0xa0] sm:$0xff]
        %v1858 = vld [vmem:[%s837 + $0xa8] sm:$0xff]
        %v1859 = vld [vmem:[%s837 + $0xb0] sm:$0xff]
        %v1860 = vld [vmem:[%s837 + $0xb8] sm:$0xff]
        %v1861 = vld [vmem:[%s837 + $0xc0] sm:$0xff]
        %v1862 = vld [vmem:[%s837 + $0xc8] sm:$0xff]
        %v1863 = vld [vmem:[%s837 + $0xd0] sm:$0xff]
        %v1864 = vld [vmem:[%s837 + $0xd8] sm:$0xff]
        %v1865 = vld [vmem:[%s837 + $0xe0] sm:$0xff]
        %v1866 = vld [vmem:[%s837 + $0xe8] sm:$0xff]
        %v1867 = vld [vmem:[%s837 + $0xf0] sm:$0xff]
        %v1868 = vld [vmem:[%s837 + $0xf8] sm:$0xff]
        %1869 = vmatprep.subr.mxu0 0.0
        %1870 = vmatpush1.msra.mxu0 %v1837
        %1871 = vmatprep.subr.mxu0 0.0
        %1872 = vmatpush1.msra.mxu0 %v1838
        %1873 = vmatprep.subr.mxu0 0.0
        %1874 = vmatpush1.msra.mxu0 %v1839
        %1875 = vmatprep.subr.mxu0 0.0
        %1876 = vmatpush1.msra.mxu0 %v1840
        %1877 = vmatprep.subr.mxu0 0.0
        %1878 = vmatpush1.msra.mxu0 %v1841
        %1879 = vmatprep.subr.mxu0 0.0
        %1880 = vmatpush1.msra.mxu0 %v1842
        %1881 = vmatprep.subr.mxu0 0.0
        %1882 = vmatpush1.msra.mxu0 %v1843
        %1883 = vmatprep.subr.mxu0 0.0
        %1884 = vmatpush1.msra.mxu0 %v1844
        %1885 = vmatprep.subr.mxu0 0.0
        %1886 = vmatpush1.msra.mxu0 %v1845
        %1887 = vmatprep.subr.mxu0 0.0
        %1888 = vmatpush1.msra.mxu0 %v1846
        %1889 = vmatprep.subr.mxu0 0.0
        %1890 = vmatpush1.msra.mxu0 %v1847
        %1891 = vmatprep.subr.mxu0 0.0
        %1892 = vmatpush1.msra.mxu0 %v1848
        %1893 = vmatprep.subr.mxu0 0.0
        %1894 = vmatpush1.msra.mxu0 %v1849
        %1895 = vmatprep.subr.mxu0 0.0
        %1896 = vmatpush1.msra.mxu0 %v1850
        %1897 = vmatprep.subr.mxu0 0.0
        %1898 = vmatpush1.msra.mxu0 %v1851
        %1899 = vmatprep.subr.mxu0 0.0
        %1900 = vmatpush1.msra.mxu0 %v1852
        %1901 = vmatprep.subr.mxu0 0.0
        %1902 = vmatpush1.msra.mxu0 %v1853
        %1903 = vmatprep.subr.mxu0 0.0
        %1904 = vmatpush1.msra.mxu0 %v1854
        %1905 = vmatprep.subr.mxu0 0.0
        %1906 = vmatpush1.msra.mxu0 %v1855
        %1907 = vmatprep.subr.mxu0 0.0
        %1908 = vmatpush1.msra.mxu0 %v1856
        %1909 = vmatprep.subr.mxu0 0.0
        %1910 = vmatpush1.msra.mxu0 %v1857
        %1911 = vmatprep.subr.mxu0 0.0
        %1912 = vmatpush1.msra.mxu0 %v1858
        %1913 = vmatprep.subr.mxu0 0.0
        %1914 = vmatpush1.msra.mxu0 %v1859
        %1915 = vmatprep.subr.mxu0 0.0
        %1916 = vmatpush1.msra.mxu0 %v1860
        %1917 = vmatprep.subr.mxu0 0.0
        %1918 = vmatpush1.msra.mxu0 %v1861
        %1919 = vmatprep.subr.mxu0 0.0
        %1920 = vmatpush1.msra.mxu0 %v1862
        %1921 = vmatprep.subr.mxu0 0.0
        %1922 = vmatpush1.msra.mxu0 %v1863
        %1923 = vmatprep.subr.mxu0 0.0
        %1924 = vmatpush1.msra.mxu0 %v1864
        %1925 = vmatprep.subr.mxu0 0.0
        %1926 = vmatpush1.msra.mxu0 %v1865
        %1927 = vmatprep.subr.mxu0 0.0
        %1928 = vmatpush1.msra.mxu0 %v1866
        %1929 = vmatprep.subr.mxu0 0.0
        %1930 = vmatpush1.msra.mxu0 %v1867
        %1931 = vmatprep.subr.mxu0 0.0
        %1932 = vmatpush1.msra.mxu0 %v1868
        %1933 = vmatprep.mubr.f32.mxu0 %v1835
        %1934 = vmatmul.mubr.f32.gmra.mrb[0].mxu0 %v1834
        %v1935 = vpop.f32.mrb[0].mxu0
        %v1936 = vadd.f32 0.0, %v1935
        %v1937 = vpop.f32.mrb[0].mxu0
        %1938 = vdwg.mxu0
        %v1939 = vadd.f32 %v1836, %v1936
        %1940 = vst [vmem:[#allocation2] sm:$0x1] %v1939
        %p1941 = scmp.eq.s32.totalorder %s24, 5
        // Predicated region
        $region83: #{efficient_net_forward.1} parent=73 // pred_check
          %p1942 = pneg %p1941
        $region84: #{efficient_net_forward.1} parent=73 // pred_check_branch
          %1944 = sbr.rel (%p1942) target = $region86
        $region85: #{efficient_net_forward.1} parent=73 // pred_region
          %v1945 = vld [vmem:[#allocation2] sm:$0x1]
          %v1946 = vlaneseq
          %v1947 = vand.u32 %v1946, 127
          %vm1948 = vcmp.lt.s32.totalorder %v1947, 10
          %v1949 = vsel %vm1948, %v1945, -1e+30
          %vm1950 = vcmask 1040384
          %v1951 = vsel %vm1950, %v1949, -inf
          %1952 = vmax.xlane.f32.xlu0 %v1951
          %v1953 = vpop.xlane.xlu0 %1952
          %v1954 = vsub.f32 %v1949, %v1953
          %v1955 = vmul.f32 %v1954, 1.442695
          %v1956 = vpow.pop %v1955
          %v1957 = vsel %vm1950, %v1956, 0.0
          %1958 = vadd.xlane.f32.xlu0 %v1957
          %v1959 = vpop.xlane.xlu0 %1958
          %v1960 = vrcp.pop %v1959
          %v1961 = vmul.f32 %v1956, %v1960
          %1962 = vst [vmem:[%s821] sm:$0x1] %v1961
        $region86: #{efficient_net_forward.1} parent=73 // pred_fallthru
          _
        %s1963 = sand.u32 %s164, 1
        %s1964 = scalar_lea.sflag [#allocation5], %s1963
        %s1965 = sand.u32 %s164, 1
        %s1966 = scalar_lea.vmem [#allocation4], %s1965
        // Predicated region
        $region87: #{efficient_net_forward.1} parent=73 // pred_check
          %p1967 = pneg %p174
        $region88: #{efficient_net_forward.1} parent=73 // pred_check_branch
          %1969 = sbr.rel (%p1967) target = $region90
        $region89: #{efficient_net_forward.1} parent=73 // pred_region
          %s1971 = ssub.s32 16, 16
          %1972 = vsyncadd %s1964, %s1971
          %s1973 = smul.addr %s23, 16
          %s1974 = scalar_lea.hbm %s5, %s1973
          %s1976 = sshll.u32 %s1966, 4
          %s1977 = int_to_ptr.vmem [resolvable:$true] %s1976
          %1979 = dma.vmem_to_hbm [thread:$0]  %s1977, 16, %s1974, %s1964
        $region90: #{efficient_net_forward.1} parent=73 // pred_fallthru
          _
      $region74: #{efficient_net_forward.1} parent=5 // pred_fallthru
        _
      %p1980 = scmp.le.s32.totalorder 2, %s14
      // Predicated region
      $region91: #{efficient_net_forward.1} parent=5 // pred_check
        %p1981 = pneg %p1980
      $region92: #{efficient_net_forward.1} parent=5 // pred_check_branch
        %1983 = sbr.rel (%p1981) target = $region94
      $region93: #{efficient_net_forward.1} parent=5 // pred_region
        %s1984 = ssub.s32 %s14, 2
        // Predicated region
        $region95: #{efficient_net_forward.1} parent=93 // pred_check
          %p1985 = pneg %p180
        $region96: #{efficient_net_forward.1} parent=93 // pred_check_branch
          %1987 = sbr.rel (%p1985) target = $region98
        $region97: #{efficient_net_forward.1} parent=93 // pred_region
          %s1988 = sand.u32 %s165, 1
          %s1989 = scalar_lea.sflag [#allocation5], %s1988
          %s1990 = sand.u32 %s165, 1
          %s1991 = scalar_lea.vmem [#allocation4], %s1990
          %1992 = dma.done %s1989, 16
        $region98: #{efficient_net_forward.1} parent=93 // pred_fallthru
          _
      $region94: #{efficient_net_forward.1} parent=5 // pred_fallthru
        _
    $region6: #{efficient_net_forward.1} parent=1 // loop_footer
      %s18 = sadd.s32 1, %s14
    $region7: #{efficient_net_forward.1} parent=1 // loop_footer_branch
      %13 = sbr.rel target = $region3
    $region8: #{efficient_net_forward.1} parent=1 // loop_exit
      _
    %1993 = vsyncpa [#allocation5], 1
    %s1994 = scalar_lea.sflag [#allocation5], 1
    %1995 = vsyncpa %s1994, 1

</llo_original>
